<compile_context>
chip_gen: v7x
topology: tpu7x:2x2x1
jax: 0.10.0
libtpu: 0.0.40
codegen_flags: <defaults>
</compile_context>

<pallas_src>
import numpy as np
import jax
import jax.numpy as jnp
from jax.experimental import pallas as pl
from jax.experimental.pallas import tpu as pltpu


_LANE = 128          # lane width (used only for VMEM footprint estimates)
_SUBLANE_BF16 = 16   # bf16 packs 16 rows per sublane group
_TM_MAX = 1024       # im2col rows per grid step; fits VMEM on v5e/v6e/v7x


def _round_up(x, m):
    return ((x + m - 1) // m) * m


def _vmem_budget(tm, kp, cout, out_itemsize):
    """Right-sized scoped-VMEM limit for one conv layer's pallas_call."""
    kp_l = _round_up(kp, _LANE)
    co_l = _round_up(cout, _LANE)
    patch = 2 * tm * kp_l * 2            # double-buffered bf16 patch tile
    wgt = 2 * kp_l * co_l * 2            # resident weights (x2 for safety)
    out = 2 * tm * co_l * out_itemsize   # double-buffered output tile
    est = int(1.5 * (patch + wgt + out)) + (4 << 20)
    return min(100 << 20, max(16 << 20, est))


def _matmul_relu_kernel(p_ref, w_ref, o_ref):
    # p_ref: (TM, Kp) bf16 patches; w_ref: (Kp, Cout) bf16 weights (resident);
    # o_ref: (TM, Cout) out_dtype.  Accumulate in f32, ReLU in f32, cast on store.
    acc = jnp.dot(p_ref[...], w_ref[...], preferred_element_type=jnp.float32)
    o_ref[...] = jnp.maximum(acc, 0.0).astype(o_ref.dtype)


def conv2d_relu_pallas(x_nhwc, wmat_bf16, *, ksize, stride, padding, out_dtype):
    """Strided conv2d (no bias) + ReLU.

    x_nhwc:    (B, H, W, Cin) activations (f32 or bf16).
    wmat_bf16: (Kp, Cout) bfloat16 filter matrix, Kp = round_up(k*k*Cin, 16),
               rows ordered (kh, kw, cin).
    Returns (B, Ho, Wo, Cout) in out_dtype (ReLU applied).
    """
    B, H, W, Cin = x_nhwc.shape
    Kp, Cout = wmat_bf16.shape
    K = ksize * ksize * Cin
    assert Kp == _round_up(K, _SUBLANE_BF16), (Kp, K)
    Ho = (H + 2 * padding - ksize) // stride + 1
    Wo = (W + 2 * padding - ksize) // stride + 1

    # --- glue: pad + im2col patch extraction (pure data layout, fused by XLA) ---
    # TODO(synk): replace with in-kernel direct/halo conv at large resolutions.
    xp = jnp.pad(x_nhwc, ((0, 0), (padding, padding), (padding, padding), (0, 0)))
    cols = []
    for kh in range(ksize):
        for kw in range(ksize):
            cols.append(
                jax.lax.slice(
                    xp,
                    (0, kh, kw, 0),
                    (B, kh + (Ho - 1) * stride + 1, kw + (Wo - 1) * stride + 1, Cin),
                    (1, stride, stride, 1),
                )
            )
    # (B, Ho, Wo, KH*KW, Cin) -> (M, K); ordering (kh, kw, cin) matches wmat packing
    M = B * Ho * Wo
    patches = jnp.stack(cols, axis=3).reshape(M, K)

    # Pad M to a multiple of TM (bf16 16-row tiles) and K to Kp; bf16 for the MXU.
    TM = min(_TM_MAX, _round_up(M, _SUBLANE_BF16))
    Mp = _round_up(M, TM)
    patches = jnp.pad(patches, ((0, Mp - M), (0, Kp - K))).astype(jnp.bfloat16)

    grid = (Mp // TM,)
    out_itemsize = jnp.dtype(out_dtype).itemsize

    out = pl.pallas_call(
        _matmul_relu_kernel,
        out_shape=jax.ShapeDtypeStruct((Mp, Cout), out_dtype),
        grid_spec=pltpu.PrefetchScalarGridSpec(
            num_scalar_prefetch=0,
            grid=grid,
            in_specs=[
                # patch row-tile, pipelined along the (parallel) M axis
                pl.BlockSpec((TM, Kp), lambda i: (i, 0)),
                # full filter matrix, constant block index -> VMEM-resident
                pl.BlockSpec((Kp, Cout), lambda i: (0, 0)),
            ],
            out_specs=pl.BlockSpec((TM, Cout), lambda i: (i, 0)),
        ),
        compiler_params=pltpu.CompilerParams(
            dimension_semantics=("parallel",),
            vmem_limit_bytes=_vmem_budget(TM, Kp, Cout, out_itemsize),
        ),
    )(patches, wmat_bf16)

    return out[:M].reshape(B, Ho, Wo, Cout)


def _pack_weights(w_hwio):
    """(KH,KW,Cin,Cout) f32 -> (round_up(KH*KW*Cin,16), Cout) bf16, rows (kh,kw,cin)."""
    KH, KW, Cin, Cout = w_hwio.shape
    K = KH * KW * Cin
    Kp = _round_up(K, _SUBLANE_BF16)
    wm = w_hwio.reshape(K, Cout)
    wm = jnp.pad(wm, ((0, Kp - K), (0, 0)))
    return wm.astype(jnp.bfloat16)


class EquivariantFeatureExtractorPallas:
    """Forward-equivalent of the PyTorch EquivariantFeatureExtractor (N=8)."""

    def __init__(self, N=8, key=jax.random.PRNGKey(42)):
        c0, c1, c2, c3 = 3, 8 * N, 16 * N, 32 * N
        k1, k2, k3 = jax.random.split(key, 3)

        def init(k, ksz, cin, cout):
            scale = 1.0 / np.sqrt(ksz * ksz * cin)
            return (scale * jax.random.normal(k, (ksz, ksz, cin, cout))).astype(jnp.float32)

        # f32 HWIO filters (also used by the XLA reference path)
        self.w1 = init(k1, 7, c0, c1)   # block1: k=7, pad=3, stride=2
        self.w2 = init(k2, 5, c1, c2)   # block2: k=5, pad=2, stride=2
        self.w3 = init(k3, 3, c2, c3)   # block3: k=3, pad=1, stride=2

        # Pallas path: exact-channel, K-padded (mult. of 16), bf16 filter matrices.
        self._wm1 = _pack_weights(self.w1)
        self._wm2 = _pack_weights(self.w2)
        self._wm3 = _pack_weights(self.w3)

    def __call__(self, x_nchw):
        x = jnp.transpose(x_nchw, (0, 2, 3, 1))                          # NCHW -> NHWC
        # Intermediates stored bf16 (halves writeback + next layer's read);
        # final layer stays f32.
        x = conv2d_relu_pallas(x, self._wm1, ksize=7, stride=2, padding=3,
                               out_dtype=jnp.bfloat16)
        x = conv2d_relu_pallas(x, self._wm2, ksize=5, stride=2, padding=2,
                               out_dtype=jnp.bfloat16)
        x = conv2d_relu_pallas(x, self._wm3, ksize=3, stride=2, padding=1,
                               out_dtype=jnp.float32)
        return jnp.transpose(x, (0, 3, 1, 2))                            # NHWC -> NCHW


def _ref_forward(x_nchw, model):
    """Plain-JAX reference (XLA convs) with the same bf16-operand / f32-acc math."""
    def conv_relu(x, w, s, p):
        y = jax.lax.conv_general_dilated(
            x.astype(jnp.bfloat16), w.astype(jnp.bfloat16),
            (s, s), [(p, p), (p, p)],
            dimension_numbers=("NCHW", "HWIO", "NCHW"),
            preferred_element_type=jnp.float32)
        return jnp.maximum(y, 0.0)
    x = conv_relu(x_nchw, model.w1, 2, 3)
    x = conv_relu(x, model.w2, 2, 2)
    x = conv_relu(x, model.w3, 2, 1)
    return x


if __name__ == "__main__":
    key = jax.random.PRNGKey(0)
    # input: batch=2, 3 channels (3 trivial reps), 16x16 spatial
    x = jax.random.normal(key, (2, 3, 16, 16), dtype=jnp.float32)

    model = EquivariantFeatureExtractorPallas(N=8)
    fwd = jax.jit(model.__call__)

    out = jax.block_until_ready(fwd(x))
    assert out.shape == (2, 256, 2, 2), out.shape
    assert out.dtype == jnp.float32

    ref = jax.block_until_ready(_ref_forward(x, model))
    np.testing.assert_allclose(np.asarray(out), np.asarray(ref), rtol=1e-2, atol=1e-2)

    print("KERNEL_OK")
</pallas_src>

<mosaic_0001>
module attributes {stable_mosaic.version = 11 : i64} {
  func.func @_matmul_relu_kernel(%arg0: i32, %arg1: memref<128x160xbf16, #tpu.memory_space<vmem>>, %arg2: memref<160x64xbf16, #tpu.memory_space<vmem>>, %arg3: memref<128x64xbf16, #tpu.memory_space<vmem>>) attributes {dimension_semantics = [#tpu.dimension_semantics<parallel>], iteration_bounds = array<i64: 1>, scalar_prefetch = 0 : i64, scratch_operands = 0 : i64, tpu.core_type = #tpu.core_type<tc>, window_params = [{transform_indices = @transform_0, window_bounds = array<i64: 128, 160>}, {pipeline_mode = #tpu.pipeline_mode<synchronous>, transform_indices = @transform_1, window_bounds = array<i64: 160, 64>}, {transform_indices = @transform_2, window_bounds = array<i64: 128, 64>}]} {
    %c0 = arith.constant 0 : index
    %c0_0 = arith.constant 0 : index
    %0 = vector.load %arg1[%c0, %c0_0] : memref<128x160xbf16, #tpu.memory_space<vmem>>, vector<128x160xbf16>
    %c0_1 = arith.constant 0 : index
    %c0_2 = arith.constant 0 : index
    %1 = vector.load %arg2[%c0_1, %c0_2] : memref<160x64xbf16, #tpu.memory_space<vmem>>, vector<160x64xbf16>
    %cst = arith.constant dense<0.000000e+00> : vector<128x64xf32>
    %2 = tpu.matmul %0, %1, %cst {dimension_numbers = #tpu.dot_dimension_numbers<[1], [0], [0], [1], [0, 0, 1, 1], [], []>} : vector<128x160xbf16>, vector<160x64xbf16>, vector<128x64xf32> -> vector<128x64xf32>
    %cst_3 = arith.constant 0.000000e+00 : f32
    %3 = vector.broadcast %cst_3 : f32 to vector<128x64xf32>
    %4 = arith.maximumf %2, %3 : vector<128x64xf32>
    %5 = arith.truncf %4 : vector<128x64xf32> to vector<128x64xbf16>
    %c0_4 = arith.constant 0 : index
    %c0_5 = arith.constant 0 : index
    %6 = vector.load %arg3[%c0_4, %c0_5] : memref<128x64xbf16, #tpu.memory_space<vmem>>, vector<128x64xbf16>
    tpu.vector_store %arg3[%c0_4, %c0_5], %5 {strides = array<i32>} : memref<128x64xbf16, #tpu.memory_space<vmem>>, vector<128x64xbf16>,
    return
  }
  func.func @transform_0(%arg0: i32) -> (i32, i32) {
    %c0_i32 = arith.constant 0 : i32
    %c0_i32_0 = arith.constant 0 : i32
    return %arg0, %c0_i32 : i32, i32
  }
  func.func @transform_1(%arg0: i32) -> (i32, i32) {
    %c0_i32 = arith.constant 0 : i32
    %c0_i32_0 = arith.constant 0 : i32
    %c0_i32_1 = arith.constant 0 : i32
    return %c0_i32, %c0_i32_0 : i32, i32
  }
  func.func @transform_2(%arg0: i32) -> (i32, i32) {
    %c0_i32 = arith.constant 0 : i32
    %c0_i32_0 = arith.constant 0 : i32
    return %arg0, %c0_i32 : i32, i32
  }
}

module attributes {stable_mosaic.version = 11 : i64} {
  func.func @_matmul_relu_kernel(%arg0: i32, %arg1: memref<32x1600xbf16, #tpu.memory_space<vmem>>, %arg2: memref<1600x128xbf16, #tpu.memory_space<vmem>>, %arg3: memref<32x128xbf16, #tpu.memory_space<vmem>>) attributes {dimension_semantics = [#tpu.dimension_semantics<parallel>], iteration_bounds = array<i64: 1>, scalar_prefetch = 0 : i64, scratch_operands = 0 : i64, tpu.core_type = #tpu.core_type<tc>, window_params = [{transform_indices = @transform_0, window_bounds = array<i64: 32, 1600>}, {pipeline_mode = #tpu.pipeline_mode<synchronous>, transform_indices = @transform_1, window_bounds = array<i64: 1600, 128>}, {transform_indices = @transform_2, window_bounds = array<i64: 32, 128>}]} {
    %c0 = arith.constant 0 : index
    %c0_0 = arith.constant 0 : index
    %0 = vector.load %arg1[%c0, %c0_0] : memref<32x1600xbf16, #tpu.memory_space<vmem>>, vector<32x1600xbf16>
    %c0_1 = arith.constant 0 : index
    %c0_2 = arith.constant 0 : index
    %1 = vector.load %arg2[%c0_1, %c0_2] : memref<1600x128xbf16, #tpu.memory_space<vmem>>, vector<1600x128xbf16>
    %cst = arith.constant dense<0.000000e+00> : vector<32x128xf32>
    %2 = tpu.matmul %0, %1, %cst {dimension_numbers = #tpu.dot_dimension_numbers<[1], [0], [0], [1], [0, 0, 1, 1], [], []>} : vector<32x1600xbf16>, vector<1600x128xbf16>, vector<32x128xf32> -> vector<32x128xf32>
    %cst_3 = arith.constant 0.000000e+00 : f32
    %3 = vector.broadcast %cst_3 : f32 to vector<32x128xf32>
    %4 = arith.maximumf %2, %3 : vector<32x128xf32>
    %5 = arith.truncf %4 : vector<32x128xf32> to vector<32x128xbf16>
    %c0_4 = arith.constant 0 : index
    %c0_5 = arith.constant 0 : index
    %6 = vector.load %arg3[%c0_4, %c0_5] : memref<32x128xbf16, #tpu.memory_space<vmem>>, vector<32x128xbf16>
    tpu.vector_store %arg3[%c0_4, %c0_5], %5 {strides = array<i32>} : memref<32x128xbf16, #tpu.memory_space<vmem>>, vector<32x128xbf16>,
    return
  }
  func.func @transform_0(%arg0: i32) -> (i32, i32) {
    %c0_i32 = arith.constant 0 : i32
    %c0_i32_0 = arith.constant 0 : i32
    return %arg0, %c0_i32 : i32, i32
  }
  func.func @transform_1(%arg0: i32) -> (i32, i32) {
    %c0_i32 = arith.constant 0 : i32
    %c0_i32_0 = arith.constant 0 : i32
    %c0_i32_1 = arith.constant 0 : i32
    return %c0_i32, %c0_i32_0 : i32, i32
  }
  func.func @transform_2(%arg0: i32) -> (i32, i32) {
    %c0_i32 = arith.constant 0 : i32
    %c0_i32_0 = arith.constant 0 : i32
    return %arg0, %c0_i32 : i32, i32
  }
}

module attributes {stable_mosaic.version = 11 : i64} {
  func.func @_matmul_relu_kernel(%arg0: i32, %arg1: memref<16x1152xbf16, #tpu.memory_space<vmem>>, %arg2: memref<1152x256xbf16, #tpu.memory_space<vmem>>, %arg3: memref<16x256xf32, #tpu.memory_space<vmem>>) attributes {dimension_semantics = [#tpu.dimension_semantics<parallel>], iteration_bounds = array<i64: 1>, scalar_prefetch = 0 : i64, scratch_operands = 0 : i64, tpu.core_type = #tpu.core_type<tc>, window_params = [{transform_indices = @transform_0, window_bounds = array<i64: 16, 1152>}, {pipeline_mode = #tpu.pipeline_mode<synchronous>, transform_indices = @transform_1, window_bounds = array<i64: 1152, 256>}, {transform_indices = @transform_2, window_bounds = array<i64: 16, 256>}]} {
    %c0 = arith.constant 0 : index
    %c0_0 = arith.constant 0 : index
    %0 = vector.load %arg1[%c0, %c0_0] : memref<16x1152xbf16, #tpu.memory_space<vmem>>, vector<16x1152xbf16>
    %c0_1 = arith.constant 0 : index
    %c0_2 = arith.constant 0 : index
    %1 = vector.load %arg2[%c0_1, %c0_2] : memref<1152x256xbf16, #tpu.memory_space<vmem>>, vector<1152x256xbf16>
    %cst = arith.constant dense<0.000000e+00> : vector<16x256xf32>
    %2 = tpu.matmul %0, %1, %cst {dimension_numbers = #tpu.dot_dimension_numbers<[1], [0], [0], [1], [0, 0, 1, 1], [], []>} : vector<16x1152xbf16>, vector<1152x256xbf16>, vector<16x256xf32> -> vector<16x256xf32>
    %cst_3 = arith.constant 0.000000e+00 : f32
    %3 = vector.broadcast %cst_3 : f32 to vector<16x256xf32>
    %4 = arith.maximumf %2, %3 : vector<16x256xf32>
    %c0_4 = arith.constant 0 : index
    %c0_5 = arith.constant 0 : index
    %5 = vector.load %arg3[%c0_4, %c0_5] : memref<16x256xf32, #tpu.memory_space<vmem>>, vector<16x256xf32>
    tpu.vector_store %arg3[%c0_4, %c0_5], %4 {strides = array<i32>} : memref<16x256xf32, #tpu.memory_space<vmem>>, vector<16x256xf32>,
    return
  }
  func.func @transform_0(%arg0: i32) -> (i32, i32) {
    %c0_i32 = arith.constant 0 : i32
    %c0_i32_0 = arith.constant 0 : i32
    return %arg0, %c0_i32 : i32, i32
  }
  func.func @transform_1(%arg0: i32) -> (i32, i32) {
    %c0_i32 = arith.constant 0 : i32
    %c0_i32_0 = arith.constant 0 : i32
    %c0_i32_1 = arith.constant 0 : i32
    return %c0_i32, %c0_i32_0 : i32, i32
  }
  func.func @transform_2(%arg0: i32) -> (i32, i32) {
    %c0_i32 = arith.constant 0 : i32
    %c0_i32_0 = arith.constant 0 : i32
    return %arg0, %c0_i32 : i32, i32
  }
}

</mosaic_0001>

<llo_original>
// kernel: a_call__.3
$region0: #{a_call__.3}
  #allocation0 [shape = 'u32[]', space=smem, size = 0x4, offset = 0x4, fixed_abs, tag = 'smem constant byte address 0x4 - core index']
  #allocation1 [shape = 'u32[144,128]{1,0:T(1,128)}', space=vmem, size = 0x12000, scoped, tag = 'internal scratch']
  %s0 = inlined_call_operand.vmem [shape: bf16[128,160], index: 0, kind: input, shape index: {}]
  %s1 = inlined_call_operand.vmem [shape: bf16[160,64], index: 1, kind: input, shape index: {}]
  %s2 = inlined_call_operand.vmem [shape: bf16[128,64], index: 2, kind: output, shape index: {}]
  %s3 = sld [smem:[#allocation0]]
  $region18: #{a_call__.3} parent=0
    _
  %s5 = ssub.s32 1, %s3
  %s6 = scalar_select 0, %s5, %s3
  // Predicated region
  $region2: #{a_call__.3} parent=0 // pred_check
    _
  $region3: #{a_call__.3} parent=0 // pred_check_branch
    %8 = sbr.rel (0) target = $region5
  $region4: #{a_call__.3} parent=0 // pred_region
    _
  $region5: #{a_call__.3} parent=0 // pred_fallthru
    _
  // Predicated region
  $region6: #{a_call__.3} parent=0 // pred_check
    _
  $region7: #{a_call__.3} parent=0 // pred_check_branch
    %10 = sbr.rel (0) target = $region9
  $region8: #{a_call__.3} parent=0 // pred_region
    _
  $region9: #{a_call__.3} parent=0 // pred_fallthru
    _
  %v12 = vld [vmem:[%s0] sm:$0xff]
  %v13 = vld [vmem:[%s0 + $0x8] sm:$0xff]
  %v14 = vld [vmem:[%s0 + $0x10] sm:$0xff]
  %v15 = vld [vmem:[%s0 + $0x18] sm:$0xff]
  %v16 = vld [vmem:[%s0 + $0x20] sm:$0xff]
  %v17 = vld [vmem:[%s0 + $0x28] sm:$0xff]
  %v18 = vld [vmem:[%s0 + $0x30] sm:$0xff]
  %v19 = vld [vmem:[%s0 + $0x38] sm:$0xff]
  %v20 = vld [vmem:[%s0 + $0x40] sm:$0xff]
  %v21 = vld [vmem:[%s0 + $0x48] sm:$0xff]
  %v22 = vld [vmem:[%s0 + $0x50] sm:$0xff]
  %v23 = vld [vmem:[%s0 + $0x58] sm:$0xff]
  %v24 = vld [vmem:[%s0 + $0x60] sm:$0xff]
  %v25 = vld [vmem:[%s0 + $0x68] sm:$0xff]
  %v26 = vld [vmem:[%s0 + $0x70] sm:$0xff]
  %v27 = vld [vmem:[%s0 + $0x78] sm:$0xff]
  %v28 = vld [vmem:[%s1] sm:$0xf]
  %v29 = vld [vmem:[%s1 + $0x4] sm:$0xf]
  %v30 = vld [vmem:[%s1 + $0x8] sm:$0xf]
  %v31 = vld [vmem:[%s1 + $0xc] sm:$0xf]
  %v32 = vld [vmem:[%s1 + $0x10] sm:$0xf]
  %v33 = vld [vmem:[%s1 + $0x14] sm:$0xf]
  %v34 = vld [vmem:[%s1 + $0x18] sm:$0xf]
  %v35 = vld [vmem:[%s1 + $0x1c] sm:$0xf]
  %v36 = vld [vmem:[%s1 + $0x20] sm:$0xf]
  %v37 = vld [vmem:[%s1 + $0x24] sm:$0xf]
  %v38 = vld [vmem:[%s1 + $0x28] sm:$0xf]
  %v39 = vld [vmem:[%s1 + $0x2c] sm:$0xf]
  %v40 = vld [vmem:[%s1 + $0x30] sm:$0xf]
  %v41 = vld [vmem:[%s1 + $0x34] sm:$0xf]
  %v42 = vld [vmem:[%s1 + $0x38] sm:$0xf]
  %v43 = vld [vmem:[%s1 + $0x3c] sm:$0xf]
  %v44 = vld [vmem:[%s1 + $0x40] sm:$0xf]
  %v45 = vld [vmem:[%s1 + $0x44] sm:$0xf]
  %v46 = vld [vmem:[%s1 + $0x48] sm:$0xf]
  %v47 = vld [vmem:[%s1 + $0x4c] sm:$0xf]
  %v64 = vunpack.c.l.b16 %v12
  %v65 = vunpack.c.h.b16 %v12
  %v66 = vunpack.c.l.b16 %v13
  %v67 = vunpack.c.h.b16 %v13
  %v68 = vunpack.c.l.b16 %v14
  %v69 = vunpack.c.h.b16 %v14
  %v70 = vunpack.c.l.b16 %v15
  %v71 = vunpack.c.h.b16 %v15
  %v72 = vunpack.c.l.b16 %v16
  %v73 = vunpack.c.h.b16 %v16
  %v74 = vunpack.c.l.b16 %v17
  %v75 = vunpack.c.h.b16 %v17
  %v76 = vunpack.c.l.b16 %v18
  %v77 = vunpack.c.h.b16 %v18
  %v78 = vunpack.c.l.b16 %v19
  %v79 = vunpack.c.h.b16 %v19
  %v80 = vunpack.c.l.b16 %v20
  %v81 = vunpack.c.h.b16 %v20
  %v82 = vunpack.c.l.b16 %v21
  %v83 = vunpack.c.h.b16 %v21
  %v84 = vunpack.c.l.b16 %v22
  %v85 = vunpack.c.h.b16 %v22
  %v86 = vunpack.c.l.b16 %v23
  %v87 = vunpack.c.h.b16 %v23
  %v88 = vunpack.c.l.b16 %v24
  %v89 = vunpack.c.h.b16 %v24
  %v90 = vunpack.c.l.b16 %v25
  %v91 = vunpack.c.h.b16 %v25
  %v92 = vunpack.c.l.b16 %v26
  %v93 = vunpack.c.h.b16 %v26
  %v94 = vunpack.c.l.b16 %v27
  %v95 = vunpack.c.h.b16 %v27
  %v96 = vpack.c.b16 %v66, %v64
  %v97 = vpack.c.b16 %v67, %v65
  %v98 = vpack.c.b16 %v70, %v68
  %v99 = vpack.c.b16 %v71, %v69
  %v100 = vpack.c.b16 %v74, %v72
  %v101 = vpack.c.b16 %v75, %v73
  %v102 = vpack.c.b16 %v78, %v76
  %v103 = vpack.c.b16 %v79, %v77
  %v104 = vpack.c.b16 %v82, %v80
  %v105 = vpack.c.b16 %v83, %v81
  %v106 = vpack.c.b16 %v86, %v84
  %v107 = vpack.c.b16 %v87, %v85
  %v108 = vpack.c.b16 %v90, %v88
  %v109 = vpack.c.b16 %v91, %v89
  %v110 = vpack.c.b16 %v94, %v92
  %v111 = vpack.c.b16 %v95, %v93
  %v140 = vunpack.c.l.b16 %v28
  %v141 = vunpack.c.l.b16 %v29
  %v142 = vunpack.c.l.b16 %v30
  %v143 = vunpack.c.l.b16 %v31
  %v144 = vunpack.c.l.b16 %v32
  %v145 = vunpack.c.l.b16 %v33
  %v146 = vunpack.c.l.b16 %v34
  %v147 = vunpack.c.l.b16 %v35
  %v148 = vunpack.c.l.b16 %v36
  %v149 = vunpack.c.l.b16 %v37
  %v150 = vunpack.c.l.b16 %v38
  %v151 = vunpack.c.l.b16 %v39
  %v152 = vunpack.c.l.b16 %v40
  %v153 = vunpack.c.l.b16 %v41
  %v154 = vunpack.c.l.b16 %v42
  %v155 = vunpack.c.l.b16 %v43
  %v156 = vunpack.c.l.b16 %v44
  %v157 = vunpack.c.l.b16 %v45
  %v158 = vunpack.c.l.b16 %v46
  %v159 = vunpack.c.l.b16 %v47
  %v160 = vpack.c.b16 %v141, %v140
  %v161 = vpack.c.b16 %v143, %v142
  %v162 = vpack.c.b16 %v145, %v144
  %v163 = vpack.c.b16 %v147, %v146
  %v164 = vpack.c.b16 %v149, %v148
  %v165 = vpack.c.b16 %v151, %v150
  %v166 = vpack.c.b16 %v153, %v152
  %v167 = vpack.c.b16 %v155, %v154
  %v168 = vpack.c.b16 %v157, %v156
  %v169 = vpack.c.b16 %v159, %v158
  %vm180 = vcmask 261120
  %v182 = vsel %vm180, %v97, 0
  %v185 = vsel %vm180, %v99, 0
  %v188 = vsel %vm180, %v101, 0
  %v191 = vsel %vm180, %v103, 0
  %v194 = vsel %vm180, %v105, 0
  %v197 = vsel %vm180, %v107, 0
  %v200 = vsel %vm180, %v109, 0
  %v203 = vsel %vm180, %v111, 0
  %205 = vmatprep.subr.bf16.mxu0 0
  %206 = vmatpush1.bf16.msra.mxu0 %v160
  %207 = vmatprep.subr.bf16.mxu0 0
  %208 = vmatpush1.bf16.msra.mxu0 %v161
  %209 = vmatprep.subr.bf16.mxu0 0
  %210 = vmatpush1.bf16.msra.mxu0 %v162
  %211 = vmatprep.subr.bf16.mxu0 0
  %212 = vmatpush1.bf16.msra.mxu0 %v163
  %213 = vmatprep.subr.bf16.mxu0 0
  %214 = vmatpush1.bf16.msra.mxu0 %v164
  %215 = vmatprep.subr.bf16.mxu0 0
  %216 = vmatpush1.bf16.msra.mxu0 %v165
  %217 = vmatprep.subr.bf16.mxu0 0
  %218 = vmatpush1.bf16.msra.mxu0 %v166
  %219 = vmatprep.subr.bf16.mxu0 0
  %220 = vmatpush1.bf16.msra.mxu0 %v167
  %221 = vmatprep.subr.bf16.mxu0 0
  %222 = vmatpush1.bf16.msra.mxu0 %v168
  %223 = vmatprep.subr.bf16.mxu0 0
  %224 = vmatpush1.bf16.msra.mxu0 %v169
  %225 = vmatprep.subr.bf16.mxu0 0
  %226 = vmatpush1.bf16.msra.mxu0 0
  %227 = vmatprep.subr.bf16.mxu0 0
  %228 = vmatpush1.bf16.msra.mxu0 0
  %229 = vmatprep.subr.bf16.mxu0 0
  %230 = vmatpush1.bf16.msra.mxu0 0
  %231 = vmatprep.subr.bf16.mxu0 0
  %232 = vmatpush1.bf16.msra.mxu0 0
  %233 = vmatprep.subr.bf16.mxu0 0
  %234 = vmatpush1.bf16.msra.mxu0 0
  %235 = vmatprep.subr.bf16.mxu0 0
  %236 = vmatpush1.bf16.msra.mxu0 0
  %237 = vmatprep.mubr.bf16.mxu0 %v182
  %238 = vmatmul.mubr.bf16.gmra.mrb[0].mxu0 %v96
  %v239 = vpop.f32.mrb[0].mxu0
  %v240 = vadd.f32 0.0, %v239
  %v241 = vpop.f32.mrb[0].mxu0
  %v242 = vpop.f32.mrb[0].mxu0
  %v243 = vadd.f32 0.0, %v242
  %v244 = vpop.f32.mrb[0].mxu0
  %245 = vmatprep.mubr.bf16.mxu0 %v185
  %246 = vmatmul.mubr.bf16.gmra.mrb[0].mxu0 %v98
  %v247 = vpop.f32.mrb[0].mxu0
  %v248 = vadd.f32 0.0, %v247
  %v249 = vpop.f32.mrb[0].mxu0
  %v250 = vpop.f32.mrb[0].mxu0
  %v251 = vadd.f32 0.0, %v250
  %v252 = vpop.f32.mrb[0].mxu0
  %253 = vmatprep.mubr.bf16.mxu0 %v188
  %254 = vmatmul.mubr.bf16.gmra.mrb[0].mxu0 %v100
  %v255 = vpop.f32.mrb[0].mxu0
  %v256 = vadd.f32 0.0, %v255
  %v257 = vpop.f32.mrb[0].mxu0
  %v258 = vpop.f32.mrb[0].mxu0
  %v259 = vadd.f32 0.0, %v258
  %v260 = vpop.f32.mrb[0].mxu0
  %261 = vmatprep.mubr.bf16.mxu0 %v191
  %262 = vmatmul.mubr.bf16.gmra.mrb[0].mxu0 %v102
  %v263 = vpop.f32.mrb[0].mxu0
  %v264 = vadd.f32 0.0, %v263
  %v265 = vpop.f32.mrb[0].mxu0
  %v266 = vpop.f32.mrb[0].mxu0
  %v267 = vadd.f32 0.0, %v266
  %v268 = vpop.f32.mrb[0].mxu0
  %269 = vmatprep.mubr.bf16.mxu0 %v194
  %270 = vmatmul.mubr.bf16.gmra.mrb[0].mxu0 %v104
  %v271 = vpop.f32.mrb[0].mxu0
  %v272 = vadd.f32 0.0, %v271
  %v273 = vpop.f32.mrb[0].mxu0
  %v274 = vpop.f32.mrb[0].mxu0
  %v275 = vadd.f32 0.0, %v274
  %v276 = vpop.f32.mrb[0].mxu0
  %277 = vmatprep.mubr.bf16.mxu0 %v197
  %278 = vmatmul.mubr.bf16.gmra.mrb[0].mxu0 %v106
  %v279 = vpop.f32.mrb[0].mxu0
  %v280 = vadd.f32 0.0, %v279
  %v281 = vpop.f32.mrb[0].mxu0
  %v282 = vpop.f32.mrb[0].mxu0
  %v283 = vadd.f32 0.0, %v282
  %v284 = vpop.f32.mrb[0].mxu0
  %285 = vmatprep.mubr.bf16.mxu0 %v200
  %286 = vmatmul.mubr.bf16.gmra.mrb[0].mxu0 %v108
  %v287 = vpop.f32.mrb[0].mxu0
  %v288 = vadd.f32 0.0, %v287
  %v289 = vpop.f32.mrb[0].mxu0
  %v290 = vpop.f32.mrb[0].mxu0
  %v291 = vadd.f32 0.0, %v290
  %v292 = vpop.f32.mrb[0].mxu0
  %293 = vmatprep.mubr.bf16.mxu0 %v203
  %294 = vmatmul.mubr.bf16.gmra.mrb[0].mxu0 %v110
  %v295 = vpop.f32.mrb[0].mxu0
  %v296 = vadd.f32 0.0, %v295
  %v297 = vpop.f32.mrb[0].mxu0
  %v298 = vpop.f32.mrb[0].mxu0
  %v299 = vadd.f32 0.0, %v298
  %v300 = vpop.f32.mrb[0].mxu0
  %301 = vdwg.mxu0
  %v302 = vmax.f32 %v240, 0.0
  %v303 = vmax.f32 %v243, 0.0
  %v304 = vmax.f32 %v248, 0.0
  %v305 = vmax.f32 %v251, 0.0
  %v306 = vmax.f32 %v256, 0.0
  %v307 = vmax.f32 %v259, 0.0
  %v308 = vmax.f32 %v264, 0.0
  %v309 = vmax.f32 %v267, 0.0
  %v310 = vmax.f32 %v272, 0.0
  %v311 = vmax.f32 %v275, 0.0
  %v312 = vmax.f32 %v280, 0.0
  %v313 = vmax.f32 %v283, 0.0
  %v314 = vmax.f32 %v288, 0.0
  %v315 = vmax.f32 %v291, 0.0
  %v316 = vmax.f32 %v296, 0.0
  %v317 = vmax.f32 %v299, 0.0
  %v318 = vpack.c.bf16 %v303, %v302
  %v319 = vpack.c.bf16 %v305, %v304
  %v320 = vpack.c.bf16 %v307, %v306
  %v321 = vpack.c.bf16 %v309, %v308
  %v322 = vpack.c.bf16 %v311, %v310
  %v323 = vpack.c.bf16 %v313, %v312
  %v324 = vpack.c.bf16 %v315, %v314
  %v325 = vpack.c.bf16 %v317, %v316
  %v334 = vunpack.c.l.b16 %v318
  %v335 = vunpack.c.h.b16 %v318
  %v336 = vunpack.c.l.b16 %v319
  %v337 = vunpack.c.h.b16 %v319
  %v338 = vunpack.c.l.b16 %v320
  %v339 = vunpack.c.h.b16 %v320
  %v340 = vunpack.c.l.b16 %v321
  %v341 = vunpack.c.h.b16 %v321
  %v342 = vunpack.c.l.b16 %v322
  %v343 = vunpack.c.h.b16 %v322
  %v344 = vunpack.c.l.b16 %v323
  %v345 = vunpack.c.h.b16 %v323
  %v346 = vunpack.c.l.b16 %v324
  %v347 = vunpack.c.h.b16 %v324
  %v348 = vunpack.c.l.b16 %v325
  %v349 = vunpack.c.h.b16 %v325
  %v350 = vpack.c.b16 %v334, %v334
  %v351 = vpack.c.b16 %v335, %v335
  %v352 = vpack.c.b16 %v336, %v336
  %v353 = vpack.c.b16 %v337, %v337
  %v354 = vpack.c.b16 %v338, %v338
  %v355 = vpack.c.b16 %v339, %v339
  %v356 = vpack.c.b16 %v340, %v340
  %v357 = vpack.c.b16 %v341, %v341
  %v358 = vpack.c.b16 %v342, %v342
  %v359 = vpack.c.b16 %v343, %v343
  %v360 = vpack.c.b16 %v344, %v344
  %v361 = vpack.c.b16 %v345, %v345
  %v362 = vpack.c.b16 %v346, %v346
  %v363 = vpack.c.b16 %v347, %v347
  %v364 = vpack.c.b16 %v348, %v348
  %v365 = vpack.c.b16 %v349, %v349
  %vm382 = vcmask 519168
  %383 = vst.msk [vmem:[%s2] sm:$0xf] %vm382, %v350
  %384 = vst.msk [vmem:[%s2 + $0x4] sm:$0xf] %vm382, %v351
  %385 = vst.msk [vmem:[%s2 + $0x8] sm:$0xf] %vm382, %v352
  %386 = vst.msk [vmem:[%s2 + $0xc] sm:$0xf] %vm382, %v353
  %387 = vst.msk [vmem:[%s2 + $0x10] sm:$0xf] %vm382, %v354
  %388 = vst.msk [vmem:[%s2 + $0x14] sm:$0xf] %vm382, %v355
  %389 = vst.msk [vmem:[%s2 + $0x18] sm:$0xf] %vm382, %v356
  %390 = vst.msk [vmem:[%s2 + $0x1c] sm:$0xf] %vm382, %v357
  %391 = vst.msk [vmem:[%s2 + $0x20] sm:$0xf] %vm382, %v358
  %392 = vst.msk [vmem:[%s2 + $0x24] sm:$0xf] %vm382, %v359
  %393 = vst.msk [vmem:[%s2 + $0x28] sm:$0xf] %vm382, %v360
  %394 = vst.msk [vmem:[%s2 + $0x2c] sm:$0xf] %vm382, %v361
  %395 = vst.msk [vmem:[%s2 + $0x30] sm:$0xf] %vm382, %v362
  %396 = vst.msk [vmem:[%s2 + $0x34] sm:$0xf] %vm382, %v363
  %397 = vst.msk [vmem:[%s2 + $0x38] sm:$0xf] %vm382, %v364
  %398 = vst.msk [vmem:[%s2 + $0x3c] sm:$0xf] %vm382, %v365
  // Predicated region
  $region10: #{a_call__.3} parent=0 // pred_check
    _
  $region11: #{a_call__.3} parent=0 // pred_check_branch
    %400 = sbr.rel (0) target = $region13
  $region12: #{a_call__.3} parent=0 // pred_region
    _
  $region13: #{a_call__.3} parent=0 // pred_fallthru
    _
  // Predicated region
  $region14: #{a_call__.3} parent=0 // pred_check
    _
  $region15: #{a_call__.3} parent=0 // pred_check_branch
    %402 = sbr.rel (0) target = $region17
  $region16: #{a_call__.3} parent=0 // pred_region
    _
  $region17: #{a_call__.3} parent=0 // pred_fallthru
    _

// kernel: a_call__.4
$region0: #{a_call__.4}
  #allocation0 [shape = 'u32[]', space=smem, size = 0x4, offset = 0x4, fixed_abs, tag = 'smem constant byte address 0x4 - core index']
  #allocation1 [shape = 'u32[144,128]{1,0:T(1,128)}', space=vmem, size = 0x12000, scoped, tag = 'internal scratch']
  %s0 = inlined_call_operand.vmem [shape: bf16[32,1600], index: 0, kind: input, shape index: {}]
  %s1 = inlined_call_operand.vmem [shape: bf16[1600,128], index: 1, kind: input, shape index: {}]
  %s2 = inlined_call_operand.vmem [shape: bf16[32,128], index: 2, kind: output, shape index: {}]
  %s3 = sld [smem:[#allocation0]]
  $region18: #{a_call__.4} parent=0
    _
  %s5 = ssub.s32 1, %s3
  %s6 = scalar_select 0, %s5, %s3
  // Predicated region
  $region2: #{a_call__.4} parent=0 // pred_check
    _
  $region3: #{a_call__.4} parent=0 // pred_check_branch
    %8 = sbr.rel (0) target = $region5
  $region4: #{a_call__.4} parent=0 // pred_region
    _
  $region5: #{a_call__.4} parent=0 // pred_fallthru
    _
  // Predicated region
  $region6: #{a_call__.4} parent=0 // pred_check
    _
  $region7: #{a_call__.4} parent=0 // pred_check_branch
    %10 = sbr.rel (0) target = $region9
  $region8: #{a_call__.4} parent=0 // pred_region
    _
  $region9: #{a_call__.4} parent=0 // pred_fallthru
    _
  %v12 = vld [vmem:[%s0] sm:$0xff]
  %v13 = vld [vmem:[%s0 + $0x8] sm:$0xff]
  %v14 = vld [vmem:[%s0 + $0x10] sm:$0xff]
  %v15 = vld [vmem:[%s0 + $0x18] sm:$0xff]
  %v16 = vld [vmem:[%s0 + $0x20] sm:$0xff]
  %v17 = vld [vmem:[%s0 + $0x28] sm:$0xff]
  %v18 = vld [vmem:[%s0 + $0x30] sm:$0xf]
  %v19 = vld [vmem:[%s0 + $0x34] sm:$0xff]
  %v20 = vld [vmem:[%s0 + $0x3c] sm:$0xff]
  %v21 = vld [vmem:[%s0 + $0x44] sm:$0xff]
  %v22 = vld [vmem:[%s0 + $0x4c] sm:$0xff]
  %v23 = vld [vmem:[%s0 + $0x54] sm:$0xff]
  %v24 = vld [vmem:[%s0 + $0x5c] sm:$0xff]
  %v25 = vld [vmem:[%s0 + $0x64] sm:$0xf]
  %v26 = vld [vmem:[%s0 + $0x68] sm:$0xff]
  %v27 = vld [vmem:[%s0 + $0x70] sm:$0xff]
  %v28 = vld [vmem:[%s0 + $0x78] sm:$0xff]
  %v29 = vld [vmem:[%s0 + $0x80] sm:$0xff]
  %v30 = vld [vmem:[%s0 + $0x88] sm:$0xff]
  %v31 = vld [vmem:[%s0 + $0x90] sm:$0xff]
  %v32 = vld [vmem:[%s0 + $0x98] sm:$0xf]
  %v33 = vld [vmem:[%s0 + $0x9c] sm:$0xff]
  %v34 = vld [vmem:[%s0 + $0xa4] sm:$0xff]
  %v35 = vld [vmem:[%s0 + $0xac] sm:$0xff]
  %v36 = vld [vmem:[%s0 + $0xb4] sm:$0xff]
  %v37 = vld [vmem:[%s0 + $0xbc] sm:$0xff]
  %v38 = vld [vmem:[%s0 + $0xc4] sm:$0xff]
  %v39 = vld [vmem:[%s0 + $0xcc] sm:$0xf]
  %v40 = vld [vmem:[%s1] sm:$0xf]
  %v41 = vld [vmem:[%s1 + $0x4] sm:$0xf]
  %v42 = vld [vmem:[%s1 + $0x8] sm:$0xf]
  %v43 = vld [vmem:[%s1 + $0xc] sm:$0xf]
  %v44 = vld [vmem:[%s1 + $0x10] sm:$0xf]
  %v45 = vld [vmem:[%s1 + $0x14] sm:$0xf]
  %v46 = vld [vmem:[%s1 + $0x18] sm:$0xf]
  %v47 = vld [vmem:[%s1 + $0x1c] sm:$0xf]
  %v48 = vld [vmem:[%s1 + $0x20] sm:$0xf]
  %v49 = vld [vmem:[%s1 + $0x24] sm:$0xf]
  %v50 = vld [vmem:[%s1 + $0x28] sm:$0xf]
  %v51 = vld [vmem:[%s1 + $0x2c] sm:$0xf]
  %v52 = vld [vmem:[%s1 + $0x30] sm:$0xf]
  %v53 = vld [vmem:[%s1 + $0x34] sm:$0xf]
  %v54 = vld [vmem:[%s1 + $0x38] sm:$0xf]
  %v55 = vld [vmem:[%s1 + $0x3c] sm:$0xf]
  %v56 = vld [vmem:[%s1 + $0x40] sm:$0xf]
  %v57 = vld [vmem:[%s1 + $0x44] sm:$0xf]
  %v58 = vld [vmem:[%s1 + $0x48] sm:$0xf]
  %v59 = vld [vmem:[%s1 + $0x4c] sm:$0xf]
  %v60 = vld [vmem:[%s1 + $0x50] sm:$0xf]
  %v61 = vld [vmem:[%s1 + $0x54] sm:$0xf]
  %v62 = vld [vmem:[%s1 + $0x58] sm:$0xf]
  %v63 = vld [vmem:[%s1 + $0x5c] sm:$0xf]
  %v64 = vld [vmem:[%s1 + $0x60] sm:$0xf]
  %v65 = vld [vmem:[%s1 + $0x64] sm:$0xf]
  %v66 = vld [vmem:[%s1 + $0x68] sm:$0xf]
  %v67 = vld [vmem:[%s1 + $0x6c] sm:$0xf]
  %v68 = vld [vmem:[%s1 + $0x70] sm:$0xf]
  %v69 = vld [vmem:[%s1 + $0x74] sm:$0xf]
  %v70 = vld [vmem:[%s1 + $0x78] sm:$0xf]
  %v71 = vld [vmem:[%s1 + $0x7c] sm:$0xf]
  %v72 = vld [vmem:[%s1 + $0x80] sm:$0xf]
  %v73 = vld [vmem:[%s1 + $0x84] sm:$0xf]
  %v74 = vld [vmem:[%s1 + $0x88] sm:$0xf]
  %v75 = vld [vmem:[%s1 + $0x8c] sm:$0xf]
  %v76 = vld [vmem:[%s1 + $0x90] sm:$0xf]
  %v77 = vld [vmem:[%s1 + $0x94] sm:$0xf]
  %v78 = vld [vmem:[%s1 + $0x98] sm:$0xf]
  %v79 = vld [vmem:[%s1 + $0x9c] sm:$0xf]
  %v80 = vld [vmem:[%s1 + $0xa0] sm:$0xf]
  %v81 = vld [vmem:[%s1 + $0xa4] sm:$0xf]
  %v82 = vld [vmem:[%s1 + $0xa8] sm:$0xf]
  %v83 = vld [vmem:[%s1 + $0xac] sm:$0xf]
  %v84 = vld [vmem:[%s1 + $0xb0] sm:$0xf]
  %v85 = vld [vmem:[%s1 + $0xb4] sm:$0xf]
  %v86 = vld [vmem:[%s1 + $0xb8] sm:$0xf]
  %v87 = vld [vmem:[%s1 + $0xbc] sm:$0xf]
  %v88 = vld [vmem:[%s1 + $0xc0] sm:$0xf]
  %v89 = vld [vmem:[%s1 + $0xc4] sm:$0xf]
  %v90 = vld [vmem:[%s1 + $0xc8] sm:$0xf]
  %v91 = vld [vmem:[%s1 + $0xcc] sm:$0xf]
  %v92 = vld [vmem:[%s1 + $0xd0] sm:$0xf]
  %v93 = vld [vmem:[%s1 + $0xd4] sm:$0xf]
  %v94 = vld [vmem:[%s1 + $0xd8] sm:$0xf]
  %v95 = vld [vmem:[%s1 + $0xdc] sm:$0xf]
  %v96 = vld [vmem:[%s1 + $0xe0] sm:$0xf]
  %v97 = vld [vmem:[%s1 + $0xe4] sm:$0xf]
  %v98 = vld [vmem:[%s1 + $0xe8] sm:$0xf]
  %v99 = vld [vmem:[%s1 + $0xec] sm:$0xf]
  %v100 = vld [vmem:[%s1 + $0xf0] sm:$0xf]
  %v101 = vld [vmem:[%s1 + $0xf4] sm:$0xf]
  %v102 = vld [vmem:[%s1 + $0xf8] sm:$0xf]
  %v103 = vld [vmem:[%s1 + $0xfc] sm:$0xf]
  %v104 = vld [vmem:[%s1 + $0x100] sm:$0xf]
  %v105 = vld [vmem:[%s1 + $0x104] sm:$0xf]
  %v106 = vld [vmem:[%s1 + $0x108] sm:$0xf]
  %v107 = vld [vmem:[%s1 + $0x10c] sm:$0xf]
  %v108 = vld [vmem:[%s1 + $0x110] sm:$0xf]
  %v109 = vld [vmem:[%s1 + $0x114] sm:$0xf]
  %v110 = vld [vmem:[%s1 + $0x118] sm:$0xf]
  %v111 = vld [vmem:[%s1 + $0x11c] sm:$0xf]
  %v112 = vld [vmem:[%s1 + $0x120] sm:$0xf]
  %v113 = vld [vmem:[%s1 + $0x124] sm:$0xf]
  %v114 = vld [vmem:[%s1 + $0x128] sm:$0xf]
  %v115 = vld [vmem:[%s1 + $0x12c] sm:$0xf]
  %v116 = vld [vmem:[%s1 + $0x130] sm:$0xf]
  %v117 = vld [vmem:[%s1 + $0x134] sm:$0xf]
  %v118 = vld [vmem:[%s1 + $0x138] sm:$0xf]
  %v119 = vld [vmem:[%s1 + $0x13c] sm:$0xf]
  %v120 = vld [vmem:[%s1 + $0x140] sm:$0xf]
  %v121 = vld [vmem:[%s1 + $0x144] sm:$0xf]
  %v122 = vld [vmem:[%s1 + $0x148] sm:$0xf]
  %v123 = vld [vmem:[%s1 + $0x14c] sm:$0xf]
  %v124 = vld [vmem:[%s1 + $0x150] sm:$0xf]
  %v125 = vld [vmem:[%s1 + $0x154] sm:$0xf]
  %v126 = vld [vmem:[%s1 + $0x158] sm:$0xf]
  %v127 = vld [vmem:[%s1 + $0x15c] sm:$0xf]
  %v128 = vld [vmem:[%s1 + $0x160] sm:$0xf]
  %v129 = vld [vmem:[%s1 + $0x164] sm:$0xf]
  %v130 = vld [vmem:[%s1 + $0x168] sm:$0xf]
  %v131 = vld [vmem:[%s1 + $0x16c] sm:$0xf]
  %v132 = vld [vmem:[%s1 + $0x170] sm:$0xf]
  %v133 = vld [vmem:[%s1 + $0x174] sm:$0xf]
  %v134 = vld [vmem:[%s1 + $0x178] sm:$0xf]
  %v135 = vld [vmem:[%s1 + $0x17c] sm:$0xf]
  %v136 = vld [vmem:[%s1 + $0x180] sm:$0xf]
  %v137 = vld [vmem:[%s1 + $0x184] sm:$0xf]
  %v138 = vld [vmem:[%s1 + $0x188] sm:$0xf]
  %v139 = vld [vmem:[%s1 + $0x18c] sm:$0xf]
  %v140 = vld [vmem:[%s1 + $0x190] sm:$0xf]
  %v141 = vld [vmem:[%s1 + $0x194] sm:$0xf]
  %v142 = vld [vmem:[%s1 + $0x198] sm:$0xf]
  %v143 = vld [vmem:[%s1 + $0x19c] sm:$0xf]
  %v144 = vld [vmem:[%s1 + $0x1a0] sm:$0xf]
  %v145 = vld [vmem:[%s1 + $0x1a4] sm:$0xf]
  %v146 = vld [vmem:[%s1 + $0x1a8] sm:$0xf]
  %v147 = vld [vmem:[%s1 + $0x1ac] sm:$0xf]
  %v148 = vld [vmem:[%s1 + $0x1b0] sm:$0xf]
  %v149 = vld [vmem:[%s1 + $0x1b4] sm:$0xf]
  %v150 = vld [vmem:[%s1 + $0x1b8] sm:$0xf]
  %v151 = vld [vmem:[%s1 + $0x1bc] sm:$0xf]
  %v152 = vld [vmem:[%s1 + $0x1c0] sm:$0xf]
  %v153 = vld [vmem:[%s1 + $0x1c4] sm:$0xf]
  %v154 = vld [vmem:[%s1 + $0x1c8] sm:$0xf]
  %v155 = vld [vmem:[%s1 + $0x1cc] sm:$0xf]
  %v156 = vld [vmem:[%s1 + $0x1d0] sm:$0xf]
  %v157 = vld [vmem:[%s1 + $0x1d4] sm:$0xf]
  %v158 = vld [vmem:[%s1 + $0x1d8] sm:$0xf]
  %v159 = vld [vmem:[%s1 + $0x1dc] sm:$0xf]
  %v160 = vld [vmem:[%s1 + $0x1e0] sm:$0xf]
  %v161 = vld [vmem:[%s1 + $0x1e4] sm:$0xf]
  %v162 = vld [vmem:[%s1 + $0x1e8] sm:$0xf]
  %v163 = vld [vmem:[%s1 + $0x1ec] sm:$0xf]
  %v164 = vld [vmem:[%s1 + $0x1f0] sm:$0xf]
  %v165 = vld [vmem:[%s1 + $0x1f4] sm:$0xf]
  %v166 = vld [vmem:[%s1 + $0x1f8] sm:$0xf]
  %v167 = vld [vmem:[%s1 + $0x1fc] sm:$0xf]
  %v168 = vld [vmem:[%s1 + $0x200] sm:$0xf]
  %v169 = vld [vmem:[%s1 + $0x204] sm:$0xf]
  %v170 = vld [vmem:[%s1 + $0x208] sm:$0xf]
  %v171 = vld [vmem:[%s1 + $0x20c] sm:$0xf]
  %v172 = vld [vmem:[%s1 + $0x210] sm:$0xf]
  %v173 = vld [vmem:[%s1 + $0x214] sm:$0xf]
  %v174 = vld [vmem:[%s1 + $0x218] sm:$0xf]
  %v175 = vld [vmem:[%s1 + $0x21c] sm:$0xf]
  %v176 = vld [vmem:[%s1 + $0x220] sm:$0xf]
  %v177 = vld [vmem:[%s1 + $0x224] sm:$0xf]
  %v178 = vld [vmem:[%s1 + $0x228] sm:$0xf]
  %v179 = vld [vmem:[%s1 + $0x22c] sm:$0xf]
  %v180 = vld [vmem:[%s1 + $0x230] sm:$0xf]
  %v181 = vld [vmem:[%s1 + $0x234] sm:$0xf]
  %v182 = vld [vmem:[%s1 + $0x238] sm:$0xf]
  %v183 = vld [vmem:[%s1 + $0x23c] sm:$0xf]
  %v184 = vld [vmem:[%s1 + $0x240] sm:$0xf]
  %v185 = vld [vmem:[%s1 + $0x244] sm:$0xf]
  %v186 = vld [vmem:[%s1 + $0x248] sm:$0xf]
  %v187 = vld [vmem:[%s1 + $0x24c] sm:$0xf]
  %v188 = vld [vmem:[%s1 + $0x250] sm:$0xf]
  %v189 = vld [vmem:[%s1 + $0x254] sm:$0xf]
  %v190 = vld [vmem:[%s1 + $0x258] sm:$0xf]
  %v191 = vld [vmem:[%s1 + $0x25c] sm:$0xf]
  %v192 = vld [vmem:[%s1 + $0x260] sm:$0xf]
  %v193 = vld [vmem:[%s1 + $0x264] sm:$0xf]
  %v194 = vld [vmem:[%s1 + $0x268] sm:$0xf]
  %v195 = vld [vmem:[%s1 + $0x26c] sm:$0xf]
  %v196 = vld [vmem:[%s1 + $0x270] sm:$0xf]
  %v197 = vld [vmem:[%s1 + $0x274] sm:$0xf]
  %v198 = vld [vmem:[%s1 + $0x278] sm:$0xf]
  %v199 = vld [vmem:[%s1 + $0x27c] sm:$0xf]
  %v200 = vld [vmem:[%s1 + $0x280] sm:$0xf]
  %v201 = vld [vmem:[%s1 + $0x284] sm:$0xf]
  %v202 = vld [vmem:[%s1 + $0x288] sm:$0xf]
  %v203 = vld [vmem:[%s1 + $0x28c] sm:$0xf]
  %v204 = vld [vmem:[%s1 + $0x290] sm:$0xf]
  %v205 = vld [vmem:[%s1 + $0x294] sm:$0xf]
  %v206 = vld [vmem:[%s1 + $0x298] sm:$0xf]
  %v207 = vld [vmem:[%s1 + $0x29c] sm:$0xf]
  %v208 = vld [vmem:[%s1 + $0x2a0] sm:$0xf]
  %v209 = vld [vmem:[%s1 + $0x2a4] sm:$0xf]
  %v210 = vld [vmem:[%s1 + $0x2a8] sm:$0xf]
  %v211 = vld [vmem:[%s1 + $0x2ac] sm:$0xf]
  %v212 = vld [vmem:[%s1 + $0x2b0] sm:$0xf]
  %v213 = vld [vmem:[%s1 + $0x2b4] sm:$0xf]
  %v214 = vld [vmem:[%s1 + $0x2b8] sm:$0xf]
  %v215 = vld [vmem:[%s1 + $0x2bc] sm:$0xf]
  %v216 = vld [vmem:[%s1 + $0x2c0] sm:$0xf]
  %v217 = vld [vmem:[%s1 + $0x2c4] sm:$0xf]
  %v218 = vld [vmem:[%s1 + $0x2c8] sm:$0xf]
  %v219 = vld [vmem:[%s1 + $0x2cc] sm:$0xf]
  %v220 = vld [vmem:[%s1 + $0x2d0] sm:$0xf]
  %v221 = vld [vmem:[%s1 + $0x2d4] sm:$0xf]
  %v222 = vld [vmem:[%s1 + $0x2d8] sm:$0xf]
  %v223 = vld [vmem:[%s1 + $0x2dc] sm:$0xf]
  %v224 = vld [vmem:[%s1 + $0x2e0] sm:$0xf]
  %v225 = vld [vmem:[%s1 + $0x2e4] sm:$0xf]
  %v226 = vld [vmem:[%s1 + $0x2e8] sm:$0xf]
  %v227 = vld [vmem:[%s1 + $0x2ec] sm:$0xf]
  %v228 = vld [vmem:[%s1 + $0x2f0] sm:$0xf]
  %v229 = vld [vmem:[%s1 + $0x2f4] sm:$0xf]
  %v230 = vld [vmem:[%s1 + $0x2f8] sm:$0xf]
  %v231 = vld [vmem:[%s1 + $0x2fc] sm:$0xf]
  %v232 = vld [vmem:[%s1 + $0x300] sm:$0xf]
  %v233 = vld [vmem:[%s1 + $0x304] sm:$0xf]
  %v234 = vld [vmem:[%s1 + $0x308] sm:$0xf]
  %v235 = vld [vmem:[%s1 + $0x30c] sm:$0xf]
  %v236 = vld [vmem:[%s1 + $0x310] sm:$0xf]
  %v237 = vld [vmem:[%s1 + $0x314] sm:$0xf]
  %v238 = vld [vmem:[%s1 + $0x318] sm:$0xf]
  %v239 = vld [vmem:[%s1 + $0x31c] sm:$0xf]
  %v268 = vunpack.c.l.b16 %v12
  %v269 = vunpack.c.h.b16 %v12
  %v270 = vunpack.c.l.b16 %v13
  %v271 = vunpack.c.h.b16 %v13
  %v272 = vunpack.c.l.b16 %v14
  %v273 = vunpack.c.h.b16 %v14
  %v274 = vunpack.c.l.b16 %v15
  %v275 = vunpack.c.h.b16 %v15
  %v276 = vunpack.c.l.b16 %v16
  %v277 = vunpack.c.h.b16 %v16
  %v278 = vunpack.c.l.b16 %v17
  %v279 = vunpack.c.h.b16 %v17
  %v280 = vunpack.c.l.b16 %v18
  %v281 = vunpack.c.l.b16 %v19
  %v282 = vunpack.c.h.b16 %v19
  %v283 = vunpack.c.l.b16 %v20
  %v284 = vunpack.c.h.b16 %v20
  %v285 = vunpack.c.l.b16 %v21
  %v286 = vunpack.c.h.b16 %v21
  %v287 = vunpack.c.l.b16 %v22
  %v288 = vunpack.c.h.b16 %v22
  %v289 = vunpack.c.l.b16 %v23
  %v290 = vunpack.c.h.b16 %v23
  %v291 = vunpack.c.l.b16 %v24
  %v292 = vunpack.c.h.b16 %v24
  %v293 = vunpack.c.l.b16 %v25
  %v294 = vunpack.c.l.b16 %v26
  %v295 = vunpack.c.h.b16 %v26
  %v296 = vunpack.c.l.b16 %v27
  %v297 = vunpack.c.h.b16 %v27
  %v298 = vunpack.c.l.b16 %v28
  %v299 = vunpack.c.h.b16 %v28
  %v300 = vunpack.c.l.b16 %v29
  %v301 = vunpack.c.h.b16 %v29
  %v302 = vunpack.c.l.b16 %v30
  %v303 = vunpack.c.h.b16 %v30
  %v304 = vunpack.c.l.b16 %v31
  %v305 = vunpack.c.h.b16 %v31
  %v306 = vunpack.c.l.b16 %v32
  %v307 = vunpack.c.l.b16 %v33
  %v308 = vunpack.c.h.b16 %v33
  %v309 = vunpack.c.l.b16 %v34
  %v310 = vunpack.c.h.b16 %v34
  %v311 = vunpack.c.l.b16 %v35
  %v312 = vunpack.c.h.b16 %v35
  %v313 = vunpack.c.l.b16 %v36
  %v314 = vunpack.c.h.b16 %v36
  %v315 = vunpack.c.l.b16 %v37
  %v316 = vunpack.c.h.b16 %v37
  %v317 = vunpack.c.l.b16 %v38
  %v318 = vunpack.c.h.b16 %v38
  %v319 = vunpack.c.l.b16 %v39
  %v320 = vpack.c.b16 %v281, %v268
  %v321 = vpack.c.b16 %v282, %v269
  %v322 = vpack.c.b16 %v283, %v270
  %v323 = vpack.c.b16 %v284, %v271
  %v324 = vpack.c.b16 %v285, %v272
  %v325 = vpack.c.b16 %v286, %v273
  %v326 = vpack.c.b16 %v287, %v274
  %v327 = vpack.c.b16 %v288, %v275
  %v328 = vpack.c.b16 %v289, %v276
  %v329 = vpack.c.b16 %v290, %v277
  %v330 = vpack.c.b16 %v291, %v278
  %v331 = vpack.c.b16 %v292, %v279
  %v332 = vpack.c.b16 %v293, %v280
  %v333 = vpack.c.b16 %v307, %v294
  %v334 = vpack.c.b16 %v308, %v295
  %v335 = vpack.c.b16 %v309, %v296
  %v336 = vpack.c.b16 %v310, %v297
  %v337 = vpack.c.b16 %v311, %v298
  %v338 = vpack.c.b16 %v312, %v299
  %v339 = vpack.c.b16 %v313, %v300
  %v340 = vpack.c.b16 %v314, %v301
  %v341 = vpack.c.b16 %v315, %v302
  %v342 = vpack.c.b16 %v316, %v303
  %v343 = vpack.c.b16 %v317, %v304
  %v344 = vpack.c.b16 %v318, %v305
  %v345 = vpack.c.b16 %v319, %v306
  %v570 = vunpack.c.l.b16 %v40
  %v571 = vunpack.c.l.b16 %v41
  %v572 = vunpack.c.l.b16 %v42
  %v573 = vunpack.c.l.b16 %v43
  %v574 = vunpack.c.l.b16 %v44
  %v575 = vunpack.c.l.b16 %v45
  %v576 = vunpack.c.l.b16 %v46
  %v577 = vunpack.c.l.b16 %v47
  %v578 = vunpack.c.l.b16 %v48
  %v579 = vunpack.c.l.b16 %v49
  %v580 = vunpack.c.l.b16 %v50
  %v581 = vunpack.c.l.b16 %v51
  %v582 = vunpack.c.l.b16 %v52
  %v583 = vunpack.c.l.b16 %v53
  %v584 = vunpack.c.l.b16 %v54
  %v585 = vunpack.c.l.b16 %v55
  %v586 = vunpack.c.l.b16 %v56
  %v587 = vunpack.c.l.b16 %v57
  %v588 = vunpack.c.l.b16 %v58
  %v589 = vunpack.c.l.b16 %v59
  %v590 = vunpack.c.l.b16 %v60
  %v591 = vunpack.c.l.b16 %v61
  %v592 = vunpack.c.l.b16 %v62
  %v593 = vunpack.c.l.b16 %v63
  %v594 = vunpack.c.l.b16 %v64
  %v595 = vunpack.c.l.b16 %v65
  %v596 = vunpack.c.l.b16 %v66
  %v597 = vunpack.c.l.b16 %v67
  %v598 = vunpack.c.l.b16 %v68
  %v599 = vunpack.c.l.b16 %v69
  %v600 = vunpack.c.l.b16 %v70
  %v601 = vunpack.c.l.b16 %v71
  %v602 = vunpack.c.l.b16 %v72
  %v603 = vunpack.c.l.b16 %v73
  %v604 = vunpack.c.l.b16 %v74
  %v605 = vunpack.c.l.b16 %v75
  %v606 = vunpack.c.l.b16 %v76
  %v607 = vunpack.c.l.b16 %v77
  %v608 = vunpack.c.l.b16 %v78
  %v609 = vunpack.c.l.b16 %v79
  %v610 = vunpack.c.l.b16 %v80
  %v611 = vunpack.c.l.b16 %v81
  %v612 = vunpack.c.l.b16 %v82
  %v613 = vunpack.c.l.b16 %v83
  %v614 = vunpack.c.l.b16 %v84
  %v615 = vunpack.c.l.b16 %v85
  %v616 = vunpack.c.l.b16 %v86
  %v617 = vunpack.c.l.b16 %v87
  %v618 = vunpack.c.l.b16 %v88
  %v619 = vunpack.c.l.b16 %v89
  %v620 = vunpack.c.l.b16 %v90
  %v621 = vunpack.c.l.b16 %v91
  %v622 = vunpack.c.l.b16 %v92
  %v623 = vunpack.c.l.b16 %v93
  %v624 = vunpack.c.l.b16 %v94
  %v625 = vunpack.c.l.b16 %v95
  %v626 = vunpack.c.l.b16 %v96
  %v627 = vunpack.c.l.b16 %v97
  %v628 = vunpack.c.l.b16 %v98
  %v629 = vunpack.c.l.b16 %v99
  %v630 = vunpack.c.l.b16 %v100
  %v631 = vunpack.c.l.b16 %v101
  %v632 = vunpack.c.l.b16 %v102
  %v633 = vunpack.c.l.b16 %v103
  %v634 = vunpack.c.l.b16 %v104
  %v635 = vunpack.c.l.b16 %v105
  %v636 = vunpack.c.l.b16 %v106
  %v637 = vunpack.c.l.b16 %v107
  %v638 = vunpack.c.l.b16 %v108
  %v639 = vunpack.c.l.b16 %v109
  %v640 = vunpack.c.l.b16 %v110
  %v641 = vunpack.c.l.b16 %v111
  %v642 = vunpack.c.l.b16 %v112
  %v643 = vunpack.c.l.b16 %v113
  %v644 = vunpack.c.l.b16 %v114
  %v645 = vunpack.c.l.b16 %v115
  %v646 = vunpack.c.l.b16 %v116
  %v647 = vunpack.c.l.b16 %v117
  %v648 = vunpack.c.l.b16 %v118
  %v649 = vunpack.c.l.b16 %v119
  %v650 = vunpack.c.l.b16 %v120
  %v651 = vunpack.c.l.b16 %v121
  %v652 = vunpack.c.l.b16 %v122
  %v653 = vunpack.c.l.b16 %v123
  %v654 = vunpack.c.l.b16 %v124
  %v655 = vunpack.c.l.b16 %v125
  %v656 = vunpack.c.l.b16 %v126
  %v657 = vunpack.c.l.b16 %v127
  %v658 = vunpack.c.l.b16 %v128
  %v659 = vunpack.c.l.b16 %v129
  %v660 = vunpack.c.l.b16 %v130
  %v661 = vunpack.c.l.b16 %v131
  %v662 = vunpack.c.l.b16 %v132
  %v663 = vunpack.c.l.b16 %v133
  %v664 = vunpack.c.l.b16 %v134
  %v665 = vunpack.c.l.b16 %v135
  %v666 = vunpack.c.l.b16 %v136
  %v667 = vunpack.c.l.b16 %v137
  %v668 = vunpack.c.l.b16 %v138
  %v669 = vunpack.c.l.b16 %v139
  %v670 = vunpack.c.l.b16 %v140
  %v671 = vunpack.c.l.b16 %v141
  %v672 = vunpack.c.l.b16 %v142
  %v673 = vunpack.c.l.b16 %v143
  %v674 = vunpack.c.l.b16 %v144
  %v675 = vunpack.c.l.b16 %v145
  %v676 = vunpack.c.l.b16 %v146
  %v677 = vunpack.c.l.b16 %v147
  %v678 = vunpack.c.l.b16 %v148
  %v679 = vunpack.c.l.b16 %v149
  %v680 = vunpack.c.l.b16 %v150
  %v681 = vunpack.c.l.b16 %v151
  %v682 = vunpack.c.l.b16 %v152
  %v683 = vunpack.c.l.b16 %v153
  %v684 = vunpack.c.l.b16 %v154
  %v685 = vunpack.c.l.b16 %v155
  %v686 = vunpack.c.l.b16 %v156
  %v687 = vunpack.c.l.b16 %v157
  %v688 = vunpack.c.l.b16 %v158
  %v689 = vunpack.c.l.b16 %v159
  %v690 = vunpack.c.l.b16 %v160
  %v691 = vunpack.c.l.b16 %v161
  %v692 = vunpack.c.l.b16 %v162
  %v693 = vunpack.c.l.b16 %v163
  %v694 = vunpack.c.l.b16 %v164
  %v695 = vunpack.c.l.b16 %v165
  %v696 = vunpack.c.l.b16 %v166
  %v697 = vunpack.c.l.b16 %v167
  %v698 = vunpack.c.l.b16 %v168
  %v699 = vunpack.c.l.b16 %v169
  %v700 = vunpack.c.l.b16 %v170
  %v701 = vunpack.c.l.b16 %v171
  %v702 = vunpack.c.l.b16 %v172
  %v703 = vunpack.c.l.b16 %v173
  %v704 = vunpack.c.l.b16 %v174
  %v705 = vunpack.c.l.b16 %v175
  %v706 = vunpack.c.l.b16 %v176
  %v707 = vunpack.c.l.b16 %v177
  %v708 = vunpack.c.l.b16 %v178
  %v709 = vunpack.c.l.b16 %v179
  %v710 = vunpack.c.l.b16 %v180
  %v711 = vunpack.c.l.b16 %v181
  %v712 = vunpack.c.l.b16 %v182
  %v713 = vunpack.c.l.b16 %v183
  %v714 = vunpack.c.l.b16 %v184
  %v715 = vunpack.c.l.b16 %v185
  %v716 = vunpack.c.l.b16 %v186
  %v717 = vunpack.c.l.b16 %v187
  %v718 = vunpack.c.l.b16 %v188
  %v719 = vunpack.c.l.b16 %v189
  %v720 = vunpack.c.l.b16 %v190
  %v721 = vunpack.c.l.b16 %v191
  %v722 = vunpack.c.l.b16 %v192
  %v723 = vunpack.c.l.b16 %v193
  %v724 = vunpack.c.l.b16 %v194
  %v725 = vunpack.c.l.b16 %v195
  %v726 = vunpack.c.l.b16 %v196
  %v727 = vunpack.c.l.b16 %v197
  %v728 = vunpack.c.l.b16 %v198
  %v729 = vunpack.c.l.b16 %v199
  %v730 = vunpack.c.l.b16 %v200
  %v731 = vunpack.c.l.b16 %v201
  %v732 = vunpack.c.l.b16 %v202
  %v733 = vunpack.c.l.b16 %v203
  %v734 = vunpack.c.l.b16 %v204
  %v735 = vunpack.c.l.b16 %v205
  %v736 = vunpack.c.l.b16 %v206
  %v737 = vunpack.c.l.b16 %v207
  %v738 = vunpack.c.l.b16 %v208
  %v739 = vunpack.c.l.b16 %v209
  %v740 = vunpack.c.l.b16 %v210
  %v741 = vunpack.c.l.b16 %v211
  %v742 = vunpack.c.l.b16 %v212
  %v743 = vunpack.c.l.b16 %v213
  %v744 = vunpack.c.l.b16 %v214
  %v745 = vunpack.c.l.b16 %v215
  %v746 = vunpack.c.l.b16 %v216
  %v747 = vunpack.c.l.b16 %v217
  %v748 = vunpack.c.l.b16 %v218
  %v749 = vunpack.c.l.b16 %v219
  %v750 = vunpack.c.l.b16 %v220
  %v751 = vunpack.c.l.b16 %v221
  %v752 = vunpack.c.l.b16 %v222
  %v753 = vunpack.c.l.b16 %v223
  %v754 = vunpack.c.l.b16 %v224
  %v755 = vunpack.c.l.b16 %v225
  %v756 = vunpack.c.l.b16 %v226
  %v757 = vunpack.c.l.b16 %v227
  %v758 = vunpack.c.l.b16 %v228
  %v759 = vunpack.c.l.b16 %v229
  %v760 = vunpack.c.l.b16 %v230
  %v761 = vunpack.c.l.b16 %v231
  %v762 = vunpack.c.l.b16 %v232
  %v763 = vunpack.c.l.b16 %v233
  %v764 = vunpack.c.l.b16 %v234
  %v765 = vunpack.c.l.b16 %v235
  %v766 = vunpack.c.l.b16 %v236
  %v767 = vunpack.c.l.b16 %v237
  %v768 = vunpack.c.l.b16 %v238
  %v769 = vunpack.c.l.b16 %v239
  %v770 = vpack.c.b16 %v571, %v570
  %v771 = vpack.c.b16 %v573, %v572
  %v772 = vpack.c.b16 %v575, %v574
  %v773 = vpack.c.b16 %v577, %v576
  %v774 = vpack.c.b16 %v579, %v578
  %v775 = vpack.c.b16 %v581, %v580
  %v776 = vpack.c.b16 %v583, %v582
  %v777 = vpack.c.b16 %v585, %v584
  %v778 = vpack.c.b16 %v587, %v586
  %v779 = vpack.c.b16 %v589, %v588
  %v780 = vpack.c.b16 %v591, %v590
  %v781 = vpack.c.b16 %v593, %v592
  %v782 = vpack.c.b16 %v595, %v594
  %v783 = vpack.c.b16 %v597, %v596
  %v784 = vpack.c.b16 %v599, %v598
  %v785 = vpack.c.b16 %v601, %v600
  %v786 = vpack.c.b16 %v603, %v602
  %v787 = vpack.c.b16 %v605, %v604
  %v788 = vpack.c.b16 %v607, %v606
  %v789 = vpack.c.b16 %v609, %v608
  %v790 = vpack.c.b16 %v611, %v610
  %v791 = vpack.c.b16 %v613, %v612
  %v792 = vpack.c.b16 %v615, %v614
  %v793 = vpack.c.b16 %v617, %v616
  %v794 = vpack.c.b16 %v619, %v618
  %v795 = vpack.c.b16 %v621, %v620
  %v796 = vpack.c.b16 %v623, %v622
  %v797 = vpack.c.b16 %v625, %v624
  %v798 = vpack.c.b16 %v627, %v626
  %v799 = vpack.c.b16 %v629, %v628
  %v800 = vpack.c.b16 %v631, %v630
  %v801 = vpack.c.b16 %v633, %v632
  %v802 = vpack.c.b16 %v635, %v634
  %v803 = vpack.c.b16 %v637, %v636
  %v804 = vpack.c.b16 %v639, %v638
  %v805 = vpack.c.b16 %v641, %v640
  %v806 = vpack.c.b16 %v643, %v642
  %v807 = vpack.c.b16 %v645, %v644
  %v808 = vpack.c.b16 %v647, %v646
  %v809 = vpack.c.b16 %v649, %v648
  %v810 = vpack.c.b16 %v651, %v650
  %v811 = vpack.c.b16 %v653, %v652
  %v812 = vpack.c.b16 %v655, %v654
  %v813 = vpack.c.b16 %v657, %v656
  %v814 = vpack.c.b16 %v659, %v658
  %v815 = vpack.c.b16 %v661, %v660
  %v816 = vpack.c.b16 %v663, %v662
  %v817 = vpack.c.b16 %v665, %v664
  %v818 = vpack.c.b16 %v667, %v666
  %v819 = vpack.c.b16 %v669, %v668
  %v820 = vpack.c.b16 %v671, %v670
  %v821 = vpack.c.b16 %v673, %v672
  %v822 = vpack.c.b16 %v675, %v674
  %v823 = vpack.c.b16 %v677, %v676
  %v824 = vpack.c.b16 %v679, %v678
  %v825 = vpack.c.b16 %v681, %v680
  %v826 = vpack.c.b16 %v683, %v682
  %v827 = vpack.c.b16 %v685, %v684
  %v828 = vpack.c.b16 %v687, %v686
  %v829 = vpack.c.b16 %v689, %v688
  %v830 = vpack.c.b16 %v691, %v690
  %v831 = vpack.c.b16 %v693, %v692
  %v832 = vpack.c.b16 %v695, %v694
  %v833 = vpack.c.b16 %v697, %v696
  %v834 = vpack.c.b16 %v699, %v698
  %v835 = vpack.c.b16 %v701, %v700
  %v836 = vpack.c.b16 %v703, %v702
  %v837 = vpack.c.b16 %v705, %v704
  %v838 = vpack.c.b16 %v707, %v706
  %v839 = vpack.c.b16 %v709, %v708
  %v840 = vpack.c.b16 %v711, %v710
  %v841 = vpack.c.b16 %v713, %v712
  %v842 = vpack.c.b16 %v715, %v714
  %v843 = vpack.c.b16 %v717, %v716
  %v844 = vpack.c.b16 %v719, %v718
  %v845 = vpack.c.b16 %v721, %v720
  %v846 = vpack.c.b16 %v723, %v722
  %v847 = vpack.c.b16 %v725, %v724
  %v848 = vpack.c.b16 %v727, %v726
  %v849 = vpack.c.b16 %v729, %v728
  %v850 = vpack.c.b16 %v731, %v730
  %v851 = vpack.c.b16 %v733, %v732
  %v852 = vpack.c.b16 %v735, %v734
  %v853 = vpack.c.b16 %v737, %v736
  %v854 = vpack.c.b16 %v739, %v738
  %v855 = vpack.c.b16 %v741, %v740
  %v856 = vpack.c.b16 %v743, %v742
  %v857 = vpack.c.b16 %v745, %v744
  %v858 = vpack.c.b16 %v747, %v746
  %v859 = vpack.c.b16 %v749, %v748
  %v860 = vpack.c.b16 %v751, %v750
  %v861 = vpack.c.b16 %v753, %v752
  %v862 = vpack.c.b16 %v755, %v754
  %v863 = vpack.c.b16 %v757, %v756
  %v864 = vpack.c.b16 %v759, %v758
  %v865 = vpack.c.b16 %v761, %v760
  %v866 = vpack.c.b16 %v763, %v762
  %v867 = vpack.c.b16 %v765, %v764
  %v868 = vpack.c.b16 %v767, %v766
  %v869 = vpack.c.b16 %v769, %v768
  %vm970 = vcmask 523264
  %v972 = vsel %vm970, %v332, 0
  %v975 = vsel %vm970, %v345, 0
  %977 = vmatprep.subr.bf16.mxu0 0
  %978 = vmatpush1.bf16.msra.mxu0 %v770
  %979 = vmatprep.subr.bf16.mxu0 0
  %980 = vmatpush1.bf16.msra.mxu0 %v771
  %981 = vmatprep.subr.bf16.mxu0 0
  %982 = vmatpush1.bf16.msra.mxu0 %v772
  %983 = vmatprep.subr.bf16.mxu0 0
  %984 = vmatpush1.bf16.msra.mxu0 %v773
  %985 = vmatprep.subr.bf16.mxu0 0
  %986 = vmatpush1.bf16.msra.mxu0 %v774
  %987 = vmatprep.subr.bf16.mxu0 0
  %988 = vmatpush1.bf16.msra.mxu0 %v775
  %989 = vmatprep.subr.bf16.mxu0 0
  %990 = vmatpush1.bf16.msra.mxu0 %v776
  %991 = vmatprep.subr.bf16.mxu0 0
  %992 = vmatpush1.bf16.msra.mxu0 %v777
  %993 = vmatprep.subr.bf16.mxu0 0
  %994 = vmatpush1.bf16.msra.mxu0 %v778
  %995 = vmatprep.subr.bf16.mxu0 0
  %996 = vmatpush1.bf16.msra.mxu0 %v779
  %997 = vmatprep.subr.bf16.mxu0 0
  %998 = vmatpush1.bf16.msra.mxu0 %v780
  %999 = vmatprep.subr.bf16.mxu0 0
  %1000 = vmatpush1.bf16.msra.mxu0 %v781
  %1001 = vmatprep.subr.bf16.mxu0 0
  %1002 = vmatpush1.bf16.msra.mxu0 %v782
  %1003 = vmatprep.subr.bf16.mxu0 0
  %1004 = vmatpush1.bf16.msra.mxu0 %v783
  %1005 = vmatprep.subr.bf16.mxu0 0
  %1006 = vmatpush1.bf16.msra.mxu0 %v784
  %1007 = vmatprep.subr.bf16.mxu0 0
  %1008 = vmatpush1.bf16.msra.mxu0 %v785
  %1009 = vmatprep.mubr.bf16.mxu0 %v321
  %1010 = vmatmul.mubr.bf16.gmra.mrb[0].mxu0 %v320
  %v1011 = vpop.f32.mrb[0].mxu0
  %v1012 = vadd.f32 0.0, %v1011
  %v1013 = vpop.f32.mrb[0].mxu0
  %v1014 = vpop.f32.mrb[0].mxu0
  %v1015 = vadd.f32 0.0, %v1014
  %v1016 = vpop.f32.mrb[0].mxu0
  %1017 = vmatprep.mubr.bf16.mxu0 %v334
  %1018 = vmatmul.mubr.bf16.gmra.mrb[0].mxu0 %v333
  %v1019 = vpop.f32.mrb[0].mxu0
  %v1020 = vadd.f32 0.0, %v1019
  %v1021 = vpop.f32.mrb[0].mxu0
  %v1022 = vpop.f32.mrb[0].mxu0
  %v1023 = vadd.f32 0.0, %v1022
  %v1024 = vpop.f32.mrb[0].mxu0
  %1025 = vdwg.mxu0
  %1026 = vmatprep.subr.bf16.mxu0 0
  %1027 = vmatpush1.bf16.msra.mxu0 %v786
  %1028 = vmatprep.subr.bf16.mxu0 0
  %1029 = vmatpush1.bf16.msra.mxu0 %v787
  %1030 = vmatprep.subr.bf16.mxu0 0
  %1031 = vmatpush1.bf16.msra.mxu0 %v788
  %1032 = vmatprep.subr.bf16.mxu0 0
  %1033 = vmatpush1.bf16.msra.mxu0 %v789
  %1034 = vmatprep.subr.bf16.mxu0 0
  %1035 = vmatpush1.bf16.msra.mxu0 %v790
  %1036 = vmatprep.subr.bf16.mxu0 0
  %1037 = vmatpush1.bf16.msra.mxu0 %v791
  %1038 = vmatprep.subr.bf16.mxu0 0
  %1039 = vmatpush1.bf16.msra.mxu0 %v792
  %1040 = vmatprep.subr.bf16.mxu0 0
  %1041 = vmatpush1.bf16.msra.mxu0 %v793
  %1042 = vmatprep.subr.bf16.mxu0 0
  %1043 = vmatpush1.bf16.msra.mxu0 %v794
  %1044 = vmatprep.subr.bf16.mxu0 0
  %1045 = vmatpush1.bf16.msra.mxu0 %v795
  %1046 = vmatprep.subr.bf16.mxu0 0
  %1047 = vmatpush1.bf16.msra.mxu0 %v796
  %1048 = vmatprep.subr.bf16.mxu0 0
  %1049 = vmatpush1.bf16.msra.mxu0 %v797
  %1050 = vmatprep.subr.bf16.mxu0 0
  %1051 = vmatpush1.bf16.msra.mxu0 %v798
  %1052 = vmatprep.subr.bf16.mxu0 0
  %1053 = vmatpush1.bf16.msra.mxu0 %v799
  %1054 = vmatprep.subr.bf16.mxu0 0
  %1055 = vmatpush1.bf16.msra.mxu0 %v800
  %1056 = vmatprep.subr.bf16.mxu0 0
  %1057 = vmatpush1.bf16.msra.mxu0 %v801
  %1058 = vmatprep.mubr.bf16.mxu0 %v323
  %1059 = vmatmul.mubr.bf16.gmra.mrb[0].mxu0 %v322
  %v1060 = vpop.f32.mrb[0].mxu0
  %v1061 = vadd.f32 %v1012, %v1060
  %v1062 = vpop.f32.mrb[0].mxu0
  %v1063 = vpop.f32.mrb[0].mxu0
  %v1064 = vadd.f32 %v1015, %v1063
  %v1065 = vpop.f32.mrb[0].mxu0
  %1066 = vmatprep.mubr.bf16.mxu0 %v336
  %1067 = vmatmul.mubr.bf16.gmra.mrb[0].mxu0 %v335
  %v1068 = vpop.f32.mrb[0].mxu0
  %v1069 = vadd.f32 %v1020, %v1068
  %v1070 = vpop.f32.mrb[0].mxu0
  %v1071 = vpop.f32.mrb[0].mxu0
  %v1072 = vadd.f32 %v1023, %v1071
  %v1073 = vpop.f32.mrb[0].mxu0
  %1074 = vdwg.mxu0
  %1075 = vmatprep.subr.bf16.mxu0 0
  %1076 = vmatpush1.bf16.msra.mxu0 %v802
  %1077 = vmatprep.subr.bf16.mxu0 0
  %1078 = vmatpush1.bf16.msra.mxu0 %v803
  %1079 = vmatprep.subr.bf16.mxu0 0
  %1080 = vmatpush1.bf16.msra.mxu0 %v804
  %1081 = vmatprep.subr.bf16.mxu0 0
  %1082 = vmatpush1.bf16.msra.mxu0 %v805
  %1083 = vmatprep.subr.bf16.mxu0 0
  %1084 = vmatpush1.bf16.msra.mxu0 %v806
  %1085 = vmatprep.subr.bf16.mxu0 0
  %1086 = vmatpush1.bf16.msra.mxu0 %v807
  %1087 = vmatprep.subr.bf16.mxu0 0
  %1088 = vmatpush1.bf16.msra.mxu0 %v808
  %1089 = vmatprep.subr.bf16.mxu0 0
  %1090 = vmatpush1.bf16.msra.mxu0 %v809
  %1091 = vmatprep.subr.bf16.mxu0 0
  %1092 = vmatpush1.bf16.msra.mxu0 %v810
  %1093 = vmatprep.subr.bf16.mxu0 0
  %1094 = vmatpush1.bf16.msra.mxu0 %v811
  %1095 = vmatprep.subr.bf16.mxu0 0
  %1096 = vmatpush1.bf16.msra.mxu0 %v812
  %1097 = vmatprep.subr.bf16.mxu0 0
  %1098 = vmatpush1.bf16.msra.mxu0 %v813
  %1099 = vmatprep.subr.bf16.mxu0 0
  %1100 = vmatpush1.bf16.msra.mxu0 %v814
  %1101 = vmatprep.subr.bf16.mxu0 0
  %1102 = vmatpush1.bf16.msra.mxu0 %v815
  %1103 = vmatprep.subr.bf16.mxu0 0
  %1104 = vmatpush1.bf16.msra.mxu0 %v816
  %1105 = vmatprep.subr.bf16.mxu0 0
  %1106 = vmatpush1.bf16.msra.mxu0 %v817
  %1107 = vmatprep.mubr.bf16.mxu0 %v325
  %1108 = vmatmul.mubr.bf16.gmra.mrb[0].mxu0 %v324
  %v1109 = vpop.f32.mrb[0].mxu0
  %v1110 = vadd.f32 %v1061, %v1109
  %v1111 = vpop.f32.mrb[0].mxu0
  %v1112 = vpop.f32.mrb[0].mxu0
  %v1113 = vadd.f32 %v1064, %v1112
  %v1114 = vpop.f32.mrb[0].mxu0
  %1115 = vmatprep.mubr.bf16.mxu0 %v338
  %1116 = vmatmul.mubr.bf16.gmra.mrb[0].mxu0 %v337
  %v1117 = vpop.f32.mrb[0].mxu0
  %v1118 = vadd.f32 %v1069, %v1117
  %v1119 = vpop.f32.mrb[0].mxu0
  %v1120 = vpop.f32.mrb[0].mxu0
  %v1121 = vadd.f32 %v1072, %v1120
  %v1122 = vpop.f32.mrb[0].mxu0
  %1123 = vdwg.mxu0
  %1124 = vmatprep.subr.bf16.mxu0 0
  %1125 = vmatpush1.bf16.msra.mxu0 %v818
  %1126 = vmatprep.subr.bf16.mxu0 0
  %1127 = vmatpush1.bf16.msra.mxu0 %v819
  %1128 = vmatprep.subr.bf16.mxu0 0
  %1129 = vmatpush1.bf16.msra.mxu0 %v820
  %1130 = vmatprep.subr.bf16.mxu0 0
  %1131 = vmatpush1.bf16.msra.mxu0 %v821
  %1132 = vmatprep.subr.bf16.mxu0 0
  %1133 = vmatpush1.bf16.msra.mxu0 %v822
  %1134 = vmatprep.subr.bf16.mxu0 0
  %1135 = vmatpush1.bf16.msra.mxu0 %v823
  %1136 = vmatprep.subr.bf16.mxu0 0
  %1137 = vmatpush1.bf16.msra.mxu0 %v824
  %1138 = vmatprep.subr.bf16.mxu0 0
  %1139 = vmatpush1.bf16.msra.mxu0 %v825
  %1140 = vmatprep.subr.bf16.mxu0 0
  %1141 = vmatpush1.bf16.msra.mxu0 %v826
  %1142 = vmatprep.subr.bf16.mxu0 0
  %1143 = vmatpush1.bf16.msra.mxu0 %v827
  %1144 = vmatprep.subr.bf16.mxu0 0
  %1145 = vmatpush1.bf16.msra.mxu0 %v828
  %1146 = vmatprep.subr.bf16.mxu0 0
  %1147 = vmatpush1.bf16.msra.mxu0 %v829
  %1148 = vmatprep.subr.bf16.mxu0 0
  %1149 = vmatpush1.bf16.msra.mxu0 %v830
  %1150 = vmatprep.subr.bf16.mxu0 0
  %1151 = vmatpush1.bf16.msra.mxu0 %v831
  %1152 = vmatprep.subr.bf16.mxu0 0
  %1153 = vmatpush1.bf16.msra.mxu0 %v832
  %1154 = vmatprep.subr.bf16.mxu0 0
  %1155 = vmatpush1.bf16.msra.mxu0 %v833
  %1156 = vmatprep.mubr.bf16.mxu0 %v327
  %1157 = vmatmul.mubr.bf16.gmra.mrb[0].mxu0 %v326
  %v1158 = vpop.f32.mrb[0].mxu0
  %v1159 = vadd.f32 %v1110, %v1158
  %v1160 = vpop.f32.mrb[0].mxu0
  %v1161 = vpop.f32.mrb[0].mxu0
  %v1162 = vadd.f32 %v1113, %v1161
  %v1163 = vpop.f32.mrb[0].mxu0
  %1164 = vmatprep.mubr.bf16.mxu0 %v340
  %1165 = vmatmul.mubr.bf16.gmra.mrb[0].mxu0 %v339
  %v1166 = vpop.f32.mrb[0].mxu0
  %v1167 = vadd.f32 %v1118, %v1166
  %v1168 = vpop.f32.mrb[0].mxu0
  %v1169 = vpop.f32.mrb[0].mxu0
  %v1170 = vadd.f32 %v1121, %v1169
  %v1171 = vpop.f32.mrb[0].mxu0
  %1172 = vdwg.mxu0
  %1173 = vmatprep.subr.bf16.mxu0 0
  %1174 = vmatpush1.bf16.msra.mxu0 %v834
  %1175 = vmatprep.subr.bf16.mxu0 0
  %1176 = vmatpush1.bf16.msra.mxu0 %v835
  %1177 = vmatprep.subr.bf16.mxu0 0
  %1178 = vmatpush1.bf16.msra.mxu0 %v836
  %1179 = vmatprep.subr.bf16.mxu0 0
  %1180 = vmatpush1.bf16.msra.mxu0 %v837
  %1181 = vmatprep.subr.bf16.mxu0 0
  %1182 = vmatpush1.bf16.msra.mxu0 %v838
  %1183 = vmatprep.subr.bf16.mxu0 0
  %1184 = vmatpush1.bf16.msra.mxu0 %v839
  %1185 = vmatprep.subr.bf16.mxu0 0
  %1186 = vmatpush1.bf16.msra.mxu0 %v840
  %1187 = vmatprep.subr.bf16.mxu0 0
  %1188 = vmatpush1.bf16.msra.mxu0 %v841
  %1189 = vmatprep.subr.bf16.mxu0 0
  %1190 = vmatpush1.bf16.msra.mxu0 %v842
  %1191 = vmatprep.subr.bf16.mxu0 0
  %1192 = vmatpush1.bf16.msra.mxu0 %v843
  %1193 = vmatprep.subr.bf16.mxu0 0
  %1194 = vmatpush1.bf16.msra.mxu0 %v844
  %1195 = vmatprep.subr.bf16.mxu0 0
  %1196 = vmatpush1.bf16.msra.mxu0 %v845
  %1197 = vmatprep.subr.bf16.mxu0 0
  %1198 = vmatpush1.bf16.msra.mxu0 %v846
  %1199 = vmatprep.subr.bf16.mxu0 0
  %1200 = vmatpush1.bf16.msra.mxu0 %v847
  %1201 = vmatprep.subr.bf16.mxu0 0
  %1202 = vmatpush1.bf16.msra.mxu0 %v848
  %1203 = vmatprep.subr.bf16.mxu0 0
  %1204 = vmatpush1.bf16.msra.mxu0 %v849
  %1205 = vmatprep.mubr.bf16.mxu0 %v329
  %1206 = vmatmul.mubr.bf16.gmra.mrb[0].mxu0 %v328
  %v1207 = vpop.f32.mrb[0].mxu0
  %v1208 = vadd.f32 %v1159, %v1207
  %v1209 = vpop.f32.mrb[0].mxu0
  %v1210 = vpop.f32.mrb[0].mxu0
  %v1211 = vadd.f32 %v1162, %v1210
  %v1212 = vpop.f32.mrb[0].mxu0
  %1213 = vmatprep.mubr.bf16.mxu0 %v342
  %1214 = vmatmul.mubr.bf16.gmra.mrb[0].mxu0 %v341
  %v1215 = vpop.f32.mrb[0].mxu0
  %v1216 = vadd.f32 %v1167, %v1215
  %v1217 = vpop.f32.mrb[0].mxu0
  %v1218 = vpop.f32.mrb[0].mxu0
  %v1219 = vadd.f32 %v1170, %v1218
  %v1220 = vpop.f32.mrb[0].mxu0
  %1221 = vdwg.mxu0
  %1222 = vmatprep.subr.bf16.mxu0 0
  %1223 = vmatpush1.bf16.msra.mxu0 %v850
  %1224 = vmatprep.subr.bf16.mxu0 0
  %1225 = vmatpush1.bf16.msra.mxu0 %v851
  %1226 = vmatprep.subr.bf16.mxu0 0
  %1227 = vmatpush1.bf16.msra.mxu0 %v852
  %1228 = vmatprep.subr.bf16.mxu0 0
  %1229 = vmatpush1.bf16.msra.mxu0 %v853
  %1230 = vmatprep.subr.bf16.mxu0 0
  %1231 = vmatpush1.bf16.msra.mxu0 %v854
  %1232 = vmatprep.subr.bf16.mxu0 0
  %1233 = vmatpush1.bf16.msra.mxu0 %v855
  %1234 = vmatprep.subr.bf16.mxu0 0
  %1235 = vmatpush1.bf16.msra.mxu0 %v856
  %1236 = vmatprep.subr.bf16.mxu0 0
  %1237 = vmatpush1.bf16.msra.mxu0 %v857
  %1238 = vmatprep.subr.bf16.mxu0 0
  %1239 = vmatpush1.bf16.msra.mxu0 %v858
  %1240 = vmatprep.subr.bf16.mxu0 0
  %1241 = vmatpush1.bf16.msra.mxu0 %v859
  %1242 = vmatprep.subr.bf16.mxu0 0
  %1243 = vmatpush1.bf16.msra.mxu0 %v860
  %1244 = vmatprep.subr.bf16.mxu0 0
  %1245 = vmatpush1.bf16.msra.mxu0 %v861
  %1246 = vmatprep.subr.bf16.mxu0 0
  %1247 = vmatpush1.bf16.msra.mxu0 %v862
  %1248 = vmatprep.subr.bf16.mxu0 0
  %1249 = vmatpush1.bf16.msra.mxu0 %v863
  %1250 = vmatprep.subr.bf16.mxu0 0
  %1251 = vmatpush1.bf16.msra.mxu0 %v864
  %1252 = vmatprep.subr.bf16.mxu0 0
  %1253 = vmatpush1.bf16.msra.mxu0 %v865
  %1254 = vmatprep.mubr.bf16.mxu0 %v331
  %1255 = vmatmul.mubr.bf16.gmra.mrb[0].mxu0 %v330
  %v1256 = vpop.f32.mrb[0].mxu0
  %v1257 = vadd.f32 %v1208, %v1256
  %v1258 = vpop.f32.mrb[0].mxu0
  %v1259 = vpop.f32.mrb[0].mxu0
  %v1260 = vadd.f32 %v1211, %v1259
  %v1261 = vpop.f32.mrb[0].mxu0
  %1262 = vmatprep.mubr.bf16.mxu0 %v344
  %1263 = vmatmul.mubr.bf16.gmra.mrb[0].mxu0 %v343
  %v1264 = vpop.f32.mrb[0].mxu0
  %v1265 = vadd.f32 %v1216, %v1264
  %v1266 = vpop.f32.mrb[0].mxu0
  %v1267 = vpop.f32.mrb[0].mxu0
  %v1268 = vadd.f32 %v1219, %v1267
  %v1269 = vpop.f32.mrb[0].mxu0
  %1270 = vdwg.mxu0
  %1271 = vmatprep.subr.bf16.mxu0 0
  %1272 = vmatpush1.bf16.msra.mxu0 %v866
  %1273 = vmatprep.subr.bf16.mxu0 0
  %1274 = vmatpush1.bf16.msra.mxu0 %v867
  %1275 = vmatprep.subr.bf16.mxu0 0
  %1276 = vmatpush1.bf16.msra.mxu0 %v868
  %1277 = vmatprep.subr.bf16.mxu0 0
  %1278 = vmatpush1.bf16.msra.mxu0 %v869
  %1279 = vmatprep.subr.bf16.mxu0 0
  %1280 = vmatpush1.bf16.msra.mxu0 0
  %1281 = vmatprep.subr.bf16.mxu0 0
  %1282 = vmatpush1.bf16.msra.mxu0 0
  %1283 = vmatprep.subr.bf16.mxu0 0
  %1284 = vmatpush1.bf16.msra.mxu0 0
  %1285 = vmatprep.subr.bf16.mxu0 0
  %1286 = vmatpush1.bf16.msra.mxu0 0
  %1287 = vmatprep.subr.bf16.mxu0 0
  %1288 = vmatpush1.bf16.msra.mxu0 0
  %1289 = vmatprep.subr.bf16.mxu0 0
  %1290 = vmatpush1.bf16.msra.mxu0 0
  %1291 = vmatprep.subr.bf16.mxu0 0
  %1292 = vmatpush1.bf16.msra.mxu0 0
  %1293 = vmatprep.subr.bf16.mxu0 0
  %1294 = vmatpush1.bf16.msra.mxu0 0
  %1295 = vmatprep.subr.bf16.mxu0 0
  %1296 = vmatpush1.bf16.msra.mxu0 0
  %1297 = vmatprep.subr.bf16.mxu0 0
  %1298 = vmatpush1.bf16.msra.mxu0 0
  %1299 = vmatprep.subr.bf16.mxu0 0
  %1300 = vmatpush1.bf16.msra.mxu0 0
  %1301 = vmatprep.subr.bf16.mxu0 0
  %1302 = vmatpush1.bf16.msra.mxu0 0
  %1303 = vmatprep.mubr.bf16.mxu0 0
  %1304 = vmatmul.mubr.bf16.gmra.mrb[0].mxu0 %v972
  %v1305 = vpop.f32.mrb[0].mxu0
  %v1306 = vadd.f32 %v1257, %v1305
  %v1307 = vpop.f32.mrb[0].mxu0
  %v1308 = vpop.f32.mrb[0].mxu0
  %v1309 = vadd.f32 %v1260, %v1308
  %v1310 = vpop.f32.mrb[0].mxu0
  %1311 = vmatprep.mubr.bf16.mxu0 0
  %1312 = vmatmul.mubr.bf16.gmra.mrb[0].mxu0 %v975
  %v1313 = vpop.f32.mrb[0].mxu0
  %v1314 = vadd.f32 %v1265, %v1313
  %v1315 = vpop.f32.mrb[0].mxu0
  %v1316 = vpop.f32.mrb[0].mxu0
  %v1317 = vadd.f32 %v1268, %v1316
  %v1318 = vpop.f32.mrb[0].mxu0
  %1319 = vdwg.mxu0
  %v1320 = vmax.f32 %v1306, 0.0
  %v1321 = vmax.f32 %v1309, 0.0
  %v1322 = vmax.f32 %v1314, 0.0
  %v1323 = vmax.f32 %v1317, 0.0
  %v1324 = vpack.c.bf16 %v1321, %v1320
  %v1325 = vpack.c.bf16 %v1323, %v1322
  %v1328 = vunpack.c.l.b16 %v1324
  %v1329 = vunpack.c.h.b16 %v1324
  %v1330 = vunpack.c.l.b16 %v1325
  %v1331 = vunpack.c.h.b16 %v1325
  %v1332 = vpack.c.b16 %v1328, %v1328
  %v1333 = vpack.c.b16 %v1329, %v1329
  %v1334 = vpack.c.b16 %v1330, %v1330
  %v1335 = vpack.c.b16 %v1331, %v1331
  %1340 = vst [vmem:[%s2] sm:$0xf] %v1332
  %1341 = vst [vmem:[%s2 + $0x4] sm:$0xf] %v1333
  %1342 = vst [vmem:[%s2 + $0x8] sm:$0xf] %v1334
  %1343 = vst [vmem:[%s2 + $0xc] sm:$0xf] %v1335
  // Predicated region
  $region10: #{a_call__.4} parent=0 // pred_check
    _
  $region11: #{a_call__.4} parent=0 // pred_check_branch
    %1345 = sbr.rel (0) target = $region13
  $region12: #{a_call__.4} parent=0 // pred_region
    _
  $region13: #{a_call__.4} parent=0 // pred_fallthru
    _
  // Predicated region
  $region14: #{a_call__.4} parent=0 // pred_check
    _
  $region15: #{a_call__.4} parent=0 // pred_check_branch
    %1347 = sbr.rel (0) target = $region17
  $region16: #{a_call__.4} parent=0 // pred_region
    _
  $region17: #{a_call__.4} parent=0 // pred_fallthru
    _

// kernel: a_call__.5
$region0: #{a_call__.5}
  #allocation0 [shape = 'u32[]', space=smem, size = 0x4, offset = 0x4, fixed_abs, tag = 'smem constant byte address 0x4 - core index']
  #allocation1 [shape = 'u32[144,128]{1,0:T(1,128)}', space=vmem, size = 0x12000, scoped, tag = 'internal scratch']
  %s0 = inlined_call_operand.vmem [shape: bf16[16,1152], index: 0, kind: input, shape index: {}]
  %s1 = inlined_call_operand.vmem [shape: bf16[1152,256], index: 1, kind: input, shape index: {}]
  %s2 = inlined_call_operand.vmem [shape: f32[16,256], index: 2, kind: output, shape index: {}]
  %s3 = sld [smem:[#allocation0]]
  $region18: #{a_call__.5} parent=0
    _
  %s5 = ssub.s32 1, %s3
  %s6 = scalar_select 0, %s5, %s3
  // Predicated region
  $region2: #{a_call__.5} parent=0 // pred_check
    _
  $region3: #{a_call__.5} parent=0 // pred_check_branch
    %8 = sbr.rel (0) target = $region5
  $region4: #{a_call__.5} parent=0 // pred_region
    _
  $region5: #{a_call__.5} parent=0 // pred_fallthru
    _
  // Predicated region
  $region6: #{a_call__.5} parent=0 // pred_check
    _
  $region7: #{a_call__.5} parent=0 // pred_check_branch
    %10 = sbr.rel (0) target = $region9
  $region8: #{a_call__.5} parent=0 // pred_region
    _
  $region9: #{a_call__.5} parent=0 // pred_fallthru
    _
  %v12 = vld [vmem:[%s0] sm:$0xff]
  %v13 = vld [vmem:[%s0 + $0x8] sm:$0xff]
  %v14 = vld [vmem:[%s0 + $0x10] sm:$0xff]
  %v15 = vld [vmem:[%s0 + $0x18] sm:$0xff]
  %v16 = vld [vmem:[%s0 + $0x20] sm:$0xf]
  %v17 = vld [vmem:[%s0 + $0x24] sm:$0xff]
  %v18 = vld [vmem:[%s0 + $0x2c] sm:$0xff]
  %v19 = vld [vmem:[%s0 + $0x34] sm:$0xff]
  %v20 = vld [vmem:[%s0 + $0x3c] sm:$0xff]
  %v21 = vld [vmem:[%s0 + $0x44] sm:$0xf]
  %v22 = vld [vmem:[%s1] sm:$0xff]
  %v23 = vld [vmem:[%s1 + $0x8] sm:$0xff]
  %v24 = vld [vmem:[%s1 + $0x10] sm:$0xff]
  %v25 = vld [vmem:[%s1 + $0x18] sm:$0xff]
  %v26 = vld [vmem:[%s1 + $0x20] sm:$0xff]
  %v27 = vld [vmem:[%s1 + $0x28] sm:$0xff]
  %v28 = vld [vmem:[%s1 + $0x30] sm:$0xff]
  %v29 = vld [vmem:[%s1 + $0x38] sm:$0xff]
  %v30 = vld [vmem:[%s1 + $0x40] sm:$0xff]
  %v31 = vld [vmem:[%s1 + $0x48] sm:$0xff]
  %v32 = vld [vmem:[%s1 + $0x50] sm:$0xff]
  %v33 = vld [vmem:[%s1 + $0x58] sm:$0xff]
  %v34 = vld [vmem:[%s1 + $0x60] sm:$0xff]
  %v35 = vld [vmem:[%s1 + $0x68] sm:$0xff]
  %v36 = vld [vmem:[%s1 + $0x70] sm:$0xff]
  %v37 = vld [vmem:[%s1 + $0x78] sm:$0xff]
  %v38 = vld [vmem:[%s1 + $0x80] sm:$0xff]
  %v39 = vld [vmem:[%s1 + $0x88] sm:$0xff]
  %v40 = vld [vmem:[%s1 + $0x90] sm:$0xff]
  %v41 = vld [vmem:[%s1 + $0x98] sm:$0xff]
  %v42 = vld [vmem:[%s1 + $0xa0] sm:$0xff]
  %v43 = vld [vmem:[%s1 + $0xa8] sm:$0xff]
  %v44 = vld [vmem:[%s1 + $0xb0] sm:$0xff]
  %v45 = vld [vmem:[%s1 + $0xb8] sm:$0xff]
  %v46 = vld [vmem:[%s1 + $0xc0] sm:$0xff]
  %v47 = vld [vmem:[%s1 + $0xc8] sm:$0xff]
  %v48 = vld [vmem:[%s1 + $0xd0] sm:$0xff]
  %v49 = vld [vmem:[%s1 + $0xd8] sm:$0xff]
  %v50 = vld [vmem:[%s1 + $0xe0] sm:$0xff]
  %v51 = vld [vmem:[%s1 + $0xe8] sm:$0xff]
  %v52 = vld [vmem:[%s1 + $0xf0] sm:$0xff]
  %v53 = vld [vmem:[%s1 + $0xf8] sm:$0xff]
  %v54 = vld [vmem:[%s1 + $0x100] sm:$0xff]
  %v55 = vld [vmem:[%s1 + $0x108] sm:$0xff]
  %v56 = vld [vmem:[%s1 + $0x110] sm:$0xff]
  %v57 = vld [vmem:[%s1 + $0x118] sm:$0xff]
  %v58 = vld [vmem:[%s1 + $0x120] sm:$0xff]
  %v59 = vld [vmem:[%s1 + $0x128] sm:$0xff]
  %v60 = vld [vmem:[%s1 + $0x130] sm:$0xff]
  %v61 = vld [vmem:[%s1 + $0x138] sm:$0xff]
  %v62 = vld [vmem:[%s1 + $0x140] sm:$0xff]
  %v63 = vld [vmem:[%s1 + $0x148] sm:$0xff]
  %v64 = vld [vmem:[%s1 + $0x150] sm:$0xff]
  %v65 = vld [vmem:[%s1 + $0x158] sm:$0xff]
  %v66 = vld [vmem:[%s1 + $0x160] sm:$0xff]
  %v67 = vld [vmem:[%s1 + $0x168] sm:$0xff]
  %v68 = vld [vmem:[%s1 + $0x170] sm:$0xff]
  %v69 = vld [vmem:[%s1 + $0x178] sm:$0xff]
  %v70 = vld [vmem:[%s1 + $0x180] sm:$0xff]
  %v71 = vld [vmem:[%s1 + $0x188] sm:$0xff]
  %v72 = vld [vmem:[%s1 + $0x190] sm:$0xff]
  %v73 = vld [vmem:[%s1 + $0x198] sm:$0xff]
  %v74 = vld [vmem:[%s1 + $0x1a0] sm:$0xff]
  %v75 = vld [vmem:[%s1 + $0x1a8] sm:$0xff]
  %v76 = vld [vmem:[%s1 + $0x1b0] sm:$0xff]
  %v77 = vld [vmem:[%s1 + $0x1b8] sm:$0xff]
  %v78 = vld [vmem:[%s1 + $0x1c0] sm:$0xff]
  %v79 = vld [vmem:[%s1 + $0x1c8] sm:$0xff]
  %v80 = vld [vmem:[%s1 + $0x1d0] sm:$0xff]
  %v81 = vld [vmem:[%s1 + $0x1d8] sm:$0xff]
  %v82 = vld [vmem:[%s1 + $0x1e0] sm:$0xff]
  %v83 = vld [vmem:[%s1 + $0x1e8] sm:$0xff]
  %v84 = vld [vmem:[%s1 + $0x1f0] sm:$0xff]
  %v85 = vld [vmem:[%s1 + $0x1f8] sm:$0xff]
  %v86 = vld [vmem:[%s1 + $0x200] sm:$0xff]
  %v87 = vld [vmem:[%s1 + $0x208] sm:$0xff]
  %v88 = vld [vmem:[%s1 + $0x210] sm:$0xff]
  %v89 = vld [vmem:[%s1 + $0x218] sm:$0xff]
  %v90 = vld [vmem:[%s1 + $0x220] sm:$0xff]
  %v91 = vld [vmem:[%s1 + $0x228] sm:$0xff]
  %v92 = vld [vmem:[%s1 + $0x230] sm:$0xff]
  %v93 = vld [vmem:[%s1 + $0x238] sm:$0xff]
  %v94 = vld [vmem:[%s1 + $0x240] sm:$0xff]
  %v95 = vld [vmem:[%s1 + $0x248] sm:$0xff]
  %v96 = vld [vmem:[%s1 + $0x250] sm:$0xff]
  %v97 = vld [vmem:[%s1 + $0x258] sm:$0xff]
  %v98 = vld [vmem:[%s1 + $0x260] sm:$0xff]
  %v99 = vld [vmem:[%s1 + $0x268] sm:$0xff]
  %v100 = vld [vmem:[%s1 + $0x270] sm:$0xff]
  %v101 = vld [vmem:[%s1 + $0x278] sm:$0xff]
  %v102 = vld [vmem:[%s1 + $0x280] sm:$0xff]
  %v103 = vld [vmem:[%s1 + $0x288] sm:$0xff]
  %v104 = vld [vmem:[%s1 + $0x290] sm:$0xff]
  %v105 = vld [vmem:[%s1 + $0x298] sm:$0xff]
  %v106 = vld [vmem:[%s1 + $0x2a0] sm:$0xff]
  %v107 = vld [vmem:[%s1 + $0x2a8] sm:$0xff]
  %v108 = vld [vmem:[%s1 + $0x2b0] sm:$0xff]
  %v109 = vld [vmem:[%s1 + $0x2b8] sm:$0xff]
  %v110 = vld [vmem:[%s1 + $0x2c0] sm:$0xff]
  %v111 = vld [vmem:[%s1 + $0x2c8] sm:$0xff]
  %v112 = vld [vmem:[%s1 + $0x2d0] sm:$0xff]
  %v113 = vld [vmem:[%s1 + $0x2d8] sm:$0xff]
  %v114 = vld [vmem:[%s1 + $0x2e0] sm:$0xff]
  %v115 = vld [vmem:[%s1 + $0x2e8] sm:$0xff]
  %v116 = vld [vmem:[%s1 + $0x2f0] sm:$0xff]
  %v117 = vld [vmem:[%s1 + $0x2f8] sm:$0xff]
  %v118 = vld [vmem:[%s1 + $0x300] sm:$0xff]
  %v119 = vld [vmem:[%s1 + $0x308] sm:$0xff]
  %v120 = vld [vmem:[%s1 + $0x310] sm:$0xff]
  %v121 = vld [vmem:[%s1 + $0x318] sm:$0xff]
  %v122 = vld [vmem:[%s1 + $0x320] sm:$0xff]
  %v123 = vld [vmem:[%s1 + $0x328] sm:$0xff]
  %v124 = vld [vmem:[%s1 + $0x330] sm:$0xff]
  %v125 = vld [vmem:[%s1 + $0x338] sm:$0xff]
  %v126 = vld [vmem:[%s1 + $0x340] sm:$0xff]
  %v127 = vld [vmem:[%s1 + $0x348] sm:$0xff]
  %v128 = vld [vmem:[%s1 + $0x350] sm:$0xff]
  %v129 = vld [vmem:[%s1 + $0x358] sm:$0xff]
  %v130 = vld [vmem:[%s1 + $0x360] sm:$0xff]
  %v131 = vld [vmem:[%s1 + $0x368] sm:$0xff]
  %v132 = vld [vmem:[%s1 + $0x370] sm:$0xff]
  %v133 = vld [vmem:[%s1 + $0x378] sm:$0xff]
  %v134 = vld [vmem:[%s1 + $0x380] sm:$0xff]
  %v135 = vld [vmem:[%s1 + $0x388] sm:$0xff]
  %v136 = vld [vmem:[%s1 + $0x390] sm:$0xff]
  %v137 = vld [vmem:[%s1 + $0x398] sm:$0xff]
  %v138 = vld [vmem:[%s1 + $0x3a0] sm:$0xff]
  %v139 = vld [vmem:[%s1 + $0x3a8] sm:$0xff]
  %v140 = vld [vmem:[%s1 + $0x3b0] sm:$0xff]
  %v141 = vld [vmem:[%s1 + $0x3b8] sm:$0xff]
  %v142 = vld [vmem:[%s1 + $0x3c0] sm:$0xff]
  %v143 = vld [vmem:[%s1 + $0x3c8] sm:$0xff]
  %v144 = vld [vmem:[%s1 + $0x3d0] sm:$0xff]
  %v145 = vld [vmem:[%s1 + $0x3d8] sm:$0xff]
  %v146 = vld [vmem:[%s1 + $0x3e0] sm:$0xff]
  %v147 = vld [vmem:[%s1 + $0x3e8] sm:$0xff]
  %v148 = vld [vmem:[%s1 + $0x3f0] sm:$0xff]
  %v149 = vld [vmem:[%s1 + $0x3f8] sm:$0xff]
  %v150 = vld [vmem:[%s1 + $0x400] sm:$0xff]
  %v151 = vld [vmem:[%s1 + $0x408] sm:$0xff]
  %v152 = vld [vmem:[%s1 + $0x410] sm:$0xff]
  %v153 = vld [vmem:[%s1 + $0x418] sm:$0xff]
  %v154 = vld [vmem:[%s1 + $0x420] sm:$0xff]
  %v155 = vld [vmem:[%s1 + $0x428] sm:$0xff]
  %v156 = vld [vmem:[%s1 + $0x430] sm:$0xff]
  %v157 = vld [vmem:[%s1 + $0x438] sm:$0xff]
  %v158 = vld [vmem:[%s1 + $0x440] sm:$0xff]
  %v159 = vld [vmem:[%s1 + $0x448] sm:$0xff]
  %v160 = vld [vmem:[%s1 + $0x450] sm:$0xff]
  %v161 = vld [vmem:[%s1 + $0x458] sm:$0xff]
  %v162 = vld [vmem:[%s1 + $0x460] sm:$0xff]
  %v163 = vld [vmem:[%s1 + $0x468] sm:$0xff]
  %v164 = vld [vmem:[%s1 + $0x470] sm:$0xff]
  %v165 = vld [vmem:[%s1 + $0x478] sm:$0xff]
  %v176 = vunpack.c.l.b16 %v12
  %v177 = vunpack.c.h.b16 %v12
  %v178 = vunpack.c.l.b16 %v13
  %v179 = vunpack.c.h.b16 %v13
  %v180 = vunpack.c.l.b16 %v14
  %v181 = vunpack.c.h.b16 %v14
  %v182 = vunpack.c.l.b16 %v15
  %v183 = vunpack.c.h.b16 %v15
  %v184 = vunpack.c.l.b16 %v16
  %v185 = vunpack.c.l.b16 %v17
  %v186 = vunpack.c.h.b16 %v17
  %v187 = vunpack.c.l.b16 %v18
  %v188 = vunpack.c.h.b16 %v18
  %v189 = vunpack.c.l.b16 %v19
  %v190 = vunpack.c.h.b16 %v19
  %v191 = vunpack.c.l.b16 %v20
  %v192 = vunpack.c.h.b16 %v20
  %v193 = vunpack.c.l.b16 %v21
  %v194 = vpack.c.b16 %v185, %v176
  %v195 = vpack.c.b16 %v186, %v177
  %v196 = vpack.c.b16 %v187, %v178
  %v197 = vpack.c.b16 %v188, %v179
  %v198 = vpack.c.b16 %v189, %v180
  %v199 = vpack.c.b16 %v190, %v181
  %v200 = vpack.c.b16 %v191, %v182
  %v201 = vpack.c.b16 %v192, %v183
  %v202 = vpack.c.b16 %v193, %v184
  %v356 = vunpack.c.l.b16 %v22
  %v357 = vunpack.c.h.b16 %v22
  %v358 = vunpack.c.l.b16 %v23
  %v359 = vunpack.c.h.b16 %v23
  %v360 = vunpack.c.l.b16 %v24
  %v361 = vunpack.c.h.b16 %v24
  %v362 = vunpack.c.l.b16 %v25
  %v363 = vunpack.c.h.b16 %v25
  %v364 = vunpack.c.l.b16 %v26
  %v365 = vunpack.c.h.b16 %v26
  %v366 = vunpack.c.l.b16 %v27
  %v367 = vunpack.c.h.b16 %v27
  %v368 = vunpack.c.l.b16 %v28
  %v369 = vunpack.c.h.b16 %v28
  %v370 = vunpack.c.l.b16 %v29
  %v371 = vunpack.c.h.b16 %v29
  %v372 = vunpack.c.l.b16 %v30
  %v373 = vunpack.c.h.b16 %v30
  %v374 = vunpack.c.l.b16 %v31
  %v375 = vunpack.c.h.b16 %v31
  %v376 = vunpack.c.l.b16 %v32
  %v377 = vunpack.c.h.b16 %v32
  %v378 = vunpack.c.l.b16 %v33
  %v379 = vunpack.c.h.b16 %v33
  %v380 = vunpack.c.l.b16 %v34
  %v381 = vunpack.c.h.b16 %v34
  %v382 = vunpack.c.l.b16 %v35
  %v383 = vunpack.c.h.b16 %v35
  %v384 = vunpack.c.l.b16 %v36
  %v385 = vunpack.c.h.b16 %v36
  %v386 = vunpack.c.l.b16 %v37
  %v387 = vunpack.c.h.b16 %v37
  %v388 = vunpack.c.l.b16 %v38
  %v389 = vunpack.c.h.b16 %v38
  %v390 = vunpack.c.l.b16 %v39
  %v391 = vunpack.c.h.b16 %v39
  %v392 = vunpack.c.l.b16 %v40
  %v393 = vunpack.c.h.b16 %v40
  %v394 = vunpack.c.l.b16 %v41
  %v395 = vunpack.c.h.b16 %v41
  %v396 = vunpack.c.l.b16 %v42
  %v397 = vunpack.c.h.b16 %v42
  %v398 = vunpack.c.l.b16 %v43
  %v399 = vunpack.c.h.b16 %v43
  %v400 = vunpack.c.l.b16 %v44
  %v401 = vunpack.c.h.b16 %v44
  %v402 = vunpack.c.l.b16 %v45
  %v403 = vunpack.c.h.b16 %v45
  %v404 = vunpack.c.l.b16 %v46
  %v405 = vunpack.c.h.b16 %v46
  %v406 = vunpack.c.l.b16 %v47
  %v407 = vunpack.c.h.b16 %v47
  %v408 = vunpack.c.l.b16 %v48
  %v409 = vunpack.c.h.b16 %v48
  %v410 = vunpack.c.l.b16 %v49
  %v411 = vunpack.c.h.b16 %v49
  %v412 = vunpack.c.l.b16 %v50
  %v413 = vunpack.c.h.b16 %v50
  %v414 = vunpack.c.l.b16 %v51
  %v415 = vunpack.c.h.b16 %v51
  %v416 = vunpack.c.l.b16 %v52
  %v417 = vunpack.c.h.b16 %v52
  %v418 = vunpack.c.l.b16 %v53
  %v419 = vunpack.c.h.b16 %v53
  %v420 = vunpack.c.l.b16 %v54
  %v421 = vunpack.c.h.b16 %v54
  %v422 = vunpack.c.l.b16 %v55
  %v423 = vunpack.c.h.b16 %v55
  %v424 = vunpack.c.l.b16 %v56
  %v425 = vunpack.c.h.b16 %v56
  %v426 = vunpack.c.l.b16 %v57
  %v427 = vunpack.c.h.b16 %v57
  %v428 = vunpack.c.l.b16 %v58
  %v429 = vunpack.c.h.b16 %v58
  %v430 = vunpack.c.l.b16 %v59
  %v431 = vunpack.c.h.b16 %v59
  %v432 = vunpack.c.l.b16 %v60
  %v433 = vunpack.c.h.b16 %v60
  %v434 = vunpack.c.l.b16 %v61
  %v435 = vunpack.c.h.b16 %v61
  %v436 = vunpack.c.l.b16 %v62
  %v437 = vunpack.c.h.b16 %v62
  %v438 = vunpack.c.l.b16 %v63
  %v439 = vunpack.c.h.b16 %v63
  %v440 = vunpack.c.l.b16 %v64
  %v441 = vunpack.c.h.b16 %v64
  %v442 = vunpack.c.l.b16 %v65
  %v443 = vunpack.c.h.b16 %v65
  %v444 = vunpack.c.l.b16 %v66
  %v445 = vunpack.c.h.b16 %v66
  %v446 = vunpack.c.l.b16 %v67
  %v447 = vunpack.c.h.b16 %v67
  %v448 = vunpack.c.l.b16 %v68
  %v449 = vunpack.c.h.b16 %v68
  %v450 = vunpack.c.l.b16 %v69
  %v451 = vunpack.c.h.b16 %v69
  %v452 = vunpack.c.l.b16 %v70
  %v453 = vunpack.c.h.b16 %v70
  %v454 = vunpack.c.l.b16 %v71
  %v455 = vunpack.c.h.b16 %v71
  %v456 = vunpack.c.l.b16 %v72
  %v457 = vunpack.c.h.b16 %v72
  %v458 = vunpack.c.l.b16 %v73
  %v459 = vunpack.c.h.b16 %v73
  %v460 = vunpack.c.l.b16 %v74
  %v461 = vunpack.c.h.b16 %v74
  %v462 = vunpack.c.l.b16 %v75
  %v463 = vunpack.c.h.b16 %v75
  %v464 = vunpack.c.l.b16 %v76
  %v465 = vunpack.c.h.b16 %v76
  %v466 = vunpack.c.l.b16 %v77
  %v467 = vunpack.c.h.b16 %v77
  %v468 = vunpack.c.l.b16 %v78
  %v469 = vunpack.c.h.b16 %v78
  %v470 = vunpack.c.l.b16 %v79
  %v471 = vunpack.c.h.b16 %v79
  %v472 = vunpack.c.l.b16 %v80
  %v473 = vunpack.c.h.b16 %v80
  %v474 = vunpack.c.l.b16 %v81
  %v475 = vunpack.c.h.b16 %v81
  %v476 = vunpack.c.l.b16 %v82
  %v477 = vunpack.c.h.b16 %v82
  %v478 = vunpack.c.l.b16 %v83
  %v479 = vunpack.c.h.b16 %v83
  %v480 = vunpack.c.l.b16 %v84
  %v481 = vunpack.c.h.b16 %v84
  %v482 = vunpack.c.l.b16 %v85
  %v483 = vunpack.c.h.b16 %v85
  %v484 = vunpack.c.l.b16 %v86
  %v485 = vunpack.c.h.b16 %v86
  %v486 = vunpack.c.l.b16 %v87
  %v487 = vunpack.c.h.b16 %v87
  %v488 = vunpack.c.l.b16 %v88
  %v489 = vunpack.c.h.b16 %v88
  %v490 = vunpack.c.l.b16 %v89
  %v491 = vunpack.c.h.b16 %v89
  %v492 = vunpack.c.l.b16 %v90
  %v493 = vunpack.c.h.b16 %v90
  %v494 = vunpack.c.l.b16 %v91
  %v495 = vunpack.c.h.b16 %v91
  %v496 = vunpack.c.l.b16 %v92
  %v497 = vunpack.c.h.b16 %v92
  %v498 = vunpack.c.l.b16 %v93
  %v499 = vunpack.c.h.b16 %v93
  %v500 = vunpack.c.l.b16 %v94
  %v501 = vunpack.c.h.b16 %v94
  %v502 = vunpack.c.l.b16 %v95
  %v503 = vunpack.c.h.b16 %v95
  %v504 = vunpack.c.l.b16 %v96
  %v505 = vunpack.c.h.b16 %v96
  %v506 = vunpack.c.l.b16 %v97
  %v507 = vunpack.c.h.b16 %v97
  %v508 = vunpack.c.l.b16 %v98
  %v509 = vunpack.c.h.b16 %v98
  %v510 = vunpack.c.l.b16 %v99
  %v511 = vunpack.c.h.b16 %v99
  %v512 = vunpack.c.l.b16 %v100
  %v513 = vunpack.c.h.b16 %v100
  %v514 = vunpack.c.l.b16 %v101
  %v515 = vunpack.c.h.b16 %v101
  %v516 = vunpack.c.l.b16 %v102
  %v517 = vunpack.c.h.b16 %v102
  %v518 = vunpack.c.l.b16 %v103
  %v519 = vunpack.c.h.b16 %v103
  %v520 = vunpack.c.l.b16 %v104
  %v521 = vunpack.c.h.b16 %v104
  %v522 = vunpack.c.l.b16 %v105
  %v523 = vunpack.c.h.b16 %v105
  %v524 = vunpack.c.l.b16 %v106
  %v525 = vunpack.c.h.b16 %v106
  %v526 = vunpack.c.l.b16 %v107
  %v527 = vunpack.c.h.b16 %v107
  %v528 = vunpack.c.l.b16 %v108
  %v529 = vunpack.c.h.b16 %v108
  %v530 = vunpack.c.l.b16 %v109
  %v531 = vunpack.c.h.b16 %v109
  %v532 = vunpack.c.l.b16 %v110
  %v533 = vunpack.c.h.b16 %v110
  %v534 = vunpack.c.l.b16 %v111
  %v535 = vunpack.c.h.b16 %v111
  %v536 = vunpack.c.l.b16 %v112
  %v537 = vunpack.c.h.b16 %v112
  %v538 = vunpack.c.l.b16 %v113
  %v539 = vunpack.c.h.b16 %v113
  %v540 = vunpack.c.l.b16 %v114
  %v541 = vunpack.c.h.b16 %v114
  %v542 = vunpack.c.l.b16 %v115
  %v543 = vunpack.c.h.b16 %v115
  %v544 = vunpack.c.l.b16 %v116
  %v545 = vunpack.c.h.b16 %v116
  %v546 = vunpack.c.l.b16 %v117
  %v547 = vunpack.c.h.b16 %v117
  %v548 = vunpack.c.l.b16 %v118
  %v549 = vunpack.c.h.b16 %v118
  %v550 = vunpack.c.l.b16 %v119
  %v551 = vunpack.c.h.b16 %v119
  %v552 = vunpack.c.l.b16 %v120
  %v553 = vunpack.c.h.b16 %v120
  %v554 = vunpack.c.l.b16 %v121
  %v555 = vunpack.c.h.b16 %v121
  %v556 = vunpack.c.l.b16 %v122
  %v557 = vunpack.c.h.b16 %v122
  %v558 = vunpack.c.l.b16 %v123
  %v559 = vunpack.c.h.b16 %v123
  %v560 = vunpack.c.l.b16 %v124
  %v561 = vunpack.c.h.b16 %v124
  %v562 = vunpack.c.l.b16 %v125
  %v563 = vunpack.c.h.b16 %v125
  %v564 = vunpack.c.l.b16 %v126
  %v565 = vunpack.c.h.b16 %v126
  %v566 = vunpack.c.l.b16 %v127
  %v567 = vunpack.c.h.b16 %v127
  %v568 = vunpack.c.l.b16 %v128
  %v569 = vunpack.c.h.b16 %v128
  %v570 = vunpack.c.l.b16 %v129
  %v571 = vunpack.c.h.b16 %v129
  %v572 = vunpack.c.l.b16 %v130
  %v573 = vunpack.c.h.b16 %v130
  %v574 = vunpack.c.l.b16 %v131
  %v575 = vunpack.c.h.b16 %v131
  %v576 = vunpack.c.l.b16 %v132
  %v577 = vunpack.c.h.b16 %v132
  %v578 = vunpack.c.l.b16 %v133
  %v579 = vunpack.c.h.b16 %v133
  %v580 = vunpack.c.l.b16 %v134
  %v581 = vunpack.c.h.b16 %v134
  %v582 = vunpack.c.l.b16 %v135
  %v583 = vunpack.c.h.b16 %v135
  %v584 = vunpack.c.l.b16 %v136
  %v585 = vunpack.c.h.b16 %v136
  %v586 = vunpack.c.l.b16 %v137
  %v587 = vunpack.c.h.b16 %v137
  %v588 = vunpack.c.l.b16 %v138
  %v589 = vunpack.c.h.b16 %v138
  %v590 = vunpack.c.l.b16 %v139
  %v591 = vunpack.c.h.b16 %v139
  %v592 = vunpack.c.l.b16 %v140
  %v593 = vunpack.c.h.b16 %v140
  %v594 = vunpack.c.l.b16 %v141
  %v595 = vunpack.c.h.b16 %v141
  %v596 = vunpack.c.l.b16 %v142
  %v597 = vunpack.c.h.b16 %v142
  %v598 = vunpack.c.l.b16 %v143
  %v599 = vunpack.c.h.b16 %v143
  %v600 = vunpack.c.l.b16 %v144
  %v601 = vunpack.c.h.b16 %v144
  %v602 = vunpack.c.l.b16 %v145
  %v603 = vunpack.c.h.b16 %v145
  %v604 = vunpack.c.l.b16 %v146
  %v605 = vunpack.c.h.b16 %v146
  %v606 = vunpack.c.l.b16 %v147
  %v607 = vunpack.c.h.b16 %v147
  %v608 = vunpack.c.l.b16 %v148
  %v609 = vunpack.c.h.b16 %v148
  %v610 = vunpack.c.l.b16 %v149
  %v611 = vunpack.c.h.b16 %v149
  %v612 = vunpack.c.l.b16 %v150
  %v613 = vunpack.c.h.b16 %v150
  %v614 = vunpack.c.l.b16 %v151
  %v615 = vunpack.c.h.b16 %v151
  %v616 = vunpack.c.l.b16 %v152
  %v617 = vunpack.c.h.b16 %v152
  %v618 = vunpack.c.l.b16 %v153
  %v619 = vunpack.c.h.b16 %v153
  %v620 = vunpack.c.l.b16 %v154
  %v621 = vunpack.c.h.b16 %v154
  %v622 = vunpack.c.l.b16 %v155
  %v623 = vunpack.c.h.b16 %v155
  %v624 = vunpack.c.l.b16 %v156
  %v625 = vunpack.c.h.b16 %v156
  %v626 = vunpack.c.l.b16 %v157
  %v627 = vunpack.c.h.b16 %v157
  %v628 = vunpack.c.l.b16 %v158
  %v629 = vunpack.c.h.b16 %v158
  %v630 = vunpack.c.l.b16 %v159
  %v631 = vunpack.c.h.b16 %v159
  %v632 = vunpack.c.l.b16 %v160
  %v633 = vunpack.c.h.b16 %v160
  %v634 = vunpack.c.l.b16 %v161
  %v635 = vunpack.c.h.b16 %v161
  %v636 = vunpack.c.l.b16 %v162
  %v637 = vunpack.c.h.b16 %v162
  %v638 = vunpack.c.l.b16 %v163
  %v639 = vunpack.c.h.b16 %v163
  %v640 = vunpack.c.l.b16 %v164
  %v641 = vunpack.c.h.b16 %v164
  %v642 = vunpack.c.l.b16 %v165
  %v643 = vunpack.c.h.b16 %v165
  %v644 = vpack.c.b16 %v358, %v356
  %v645 = vpack.c.b16 %v359, %v357
  %v646 = vpack.c.b16 %v362, %v360
  %v647 = vpack.c.b16 %v363, %v361
  %v648 = vpack.c.b16 %v366, %v364
  %v649 = vpack.c.b16 %v367, %v365
  %v650 = vpack.c.b16 %v370, %v368
  %v651 = vpack.c.b16 %v371, %v369
  %v652 = vpack.c.b16 %v374, %v372
  %v653 = vpack.c.b16 %v375, %v373
  %v654 = vpack.c.b16 %v378, %v376
  %v655 = vpack.c.b16 %v379, %v377
  %v656 = vpack.c.b16 %v382, %v380
  %v657 = vpack.c.b16 %v383, %v381
  %v658 = vpack.c.b16 %v386, %v384
  %v659 = vpack.c.b16 %v387, %v385
  %v660 = vpack.c.b16 %v390, %v388
  %v661 = vpack.c.b16 %v391, %v389
  %v662 = vpack.c.b16 %v394, %v392
  %v663 = vpack.c.b16 %v395, %v393
  %v664 = vpack.c.b16 %v398, %v396
  %v665 = vpack.c.b16 %v399, %v397
  %v666 = vpack.c.b16 %v402, %v400
  %v667 = vpack.c.b16 %v403, %v401
  %v668 = vpack.c.b16 %v406, %v404
  %v669 = vpack.c.b16 %v407, %v405
  %v670 = vpack.c.b16 %v410, %v408
  %v671 = vpack.c.b16 %v411, %v409
  %v672 = vpack.c.b16 %v414, %v412
  %v673 = vpack.c.b16 %v415, %v413
  %v674 = vpack.c.b16 %v418, %v416
  %v675 = vpack.c.b16 %v419, %v417
  %v676 = vpack.c.b16 %v422, %v420
  %v677 = vpack.c.b16 %v423, %v421
  %v678 = vpack.c.b16 %v426, %v424
  %v679 = vpack.c.b16 %v427, %v425
  %v680 = vpack.c.b16 %v430, %v428
  %v681 = vpack.c.b16 %v431, %v429
  %v682 = vpack.c.b16 %v434, %v432
  %v683 = vpack.c.b16 %v435, %v433
  %v684 = vpack.c.b16 %v438, %v436
  %v685 = vpack.c.b16 %v439, %v437
  %v686 = vpack.c.b16 %v442, %v440
  %v687 = vpack.c.b16 %v443, %v441
  %v688 = vpack.c.b16 %v446, %v444
  %v689 = vpack.c.b16 %v447, %v445
  %v690 = vpack.c.b16 %v450, %v448
  %v691 = vpack.c.b16 %v451, %v449
  %v692 = vpack.c.b16 %v454, %v452
  %v693 = vpack.c.b16 %v455, %v453
  %v694 = vpack.c.b16 %v458, %v456
  %v695 = vpack.c.b16 %v459, %v457
  %v696 = vpack.c.b16 %v462, %v460
  %v697 = vpack.c.b16 %v463, %v461
  %v698 = vpack.c.b16 %v466, %v464
  %v699 = vpack.c.b16 %v467, %v465
  %v700 = vpack.c.b16 %v470, %v468
  %v701 = vpack.c.b16 %v471, %v469
  %v702 = vpack.c.b16 %v474, %v472
  %v703 = vpack.c.b16 %v475, %v473
  %v704 = vpack.c.b16 %v478, %v476
  %v705 = vpack.c.b16 %v479, %v477
  %v706 = vpack.c.b16 %v482, %v480
  %v707 = vpack.c.b16 %v483, %v481
  %v708 = vpack.c.b16 %v486, %v484
  %v709 = vpack.c.b16 %v487, %v485
  %v710 = vpack.c.b16 %v490, %v488
  %v711 = vpack.c.b16 %v491, %v489
  %v712 = vpack.c.b16 %v494, %v492
  %v713 = vpack.c.b16 %v495, %v493
  %v714 = vpack.c.b16 %v498, %v496
  %v715 = vpack.c.b16 %v499, %v497
  %v716 = vpack.c.b16 %v502, %v500
  %v717 = vpack.c.b16 %v503, %v501
  %v718 = vpack.c.b16 %v506, %v504
  %v719 = vpack.c.b16 %v507, %v505
  %v720 = vpack.c.b16 %v510, %v508
  %v721 = vpack.c.b16 %v511, %v509
  %v722 = vpack.c.b16 %v514, %v512
  %v723 = vpack.c.b16 %v515, %v513
  %v724 = vpack.c.b16 %v518, %v516
  %v725 = vpack.c.b16 %v519, %v517
  %v726 = vpack.c.b16 %v522, %v520
  %v727 = vpack.c.b16 %v523, %v521
  %v728 = vpack.c.b16 %v526, %v524
  %v729 = vpack.c.b16 %v527, %v525
  %v730 = vpack.c.b16 %v530, %v528
  %v731 = vpack.c.b16 %v531, %v529
  %v732 = vpack.c.b16 %v534, %v532
  %v733 = vpack.c.b16 %v535, %v533
  %v734 = vpack.c.b16 %v538, %v536
  %v735 = vpack.c.b16 %v539, %v537
  %v736 = vpack.c.b16 %v542, %v540
  %v737 = vpack.c.b16 %v543, %v541
  %v738 = vpack.c.b16 %v546, %v544
  %v739 = vpack.c.b16 %v547, %v545
  %v740 = vpack.c.b16 %v550, %v548
  %v741 = vpack.c.b16 %v551, %v549
  %v742 = vpack.c.b16 %v554, %v552
  %v743 = vpack.c.b16 %v555, %v553
  %v744 = vpack.c.b16 %v558, %v556
  %v745 = vpack.c.b16 %v559, %v557
  %v746 = vpack.c.b16 %v562, %v560
  %v747 = vpack.c.b16 %v563, %v561
  %v748 = vpack.c.b16 %v566, %v564
  %v749 = vpack.c.b16 %v567, %v565
  %v750 = vpack.c.b16 %v570, %v568
  %v751 = vpack.c.b16 %v571, %v569
  %v752 = vpack.c.b16 %v574, %v572
  %v753 = vpack.c.b16 %v575, %v573
  %v754 = vpack.c.b16 %v578, %v576
  %v755 = vpack.c.b16 %v579, %v577
  %v756 = vpack.c.b16 %v582, %v580
  %v757 = vpack.c.b16 %v583, %v581
  %v758 = vpack.c.b16 %v586, %v584
  %v759 = vpack.c.b16 %v587, %v585
  %v760 = vpack.c.b16 %v590, %v588
  %v761 = vpack.c.b16 %v591, %v589
  %v762 = vpack.c.b16 %v594, %v592
  %v763 = vpack.c.b16 %v595, %v593
  %v764 = vpack.c.b16 %v598, %v596
  %v765 = vpack.c.b16 %v599, %v597
  %v766 = vpack.c.b16 %v602, %v600
  %v767 = vpack.c.b16 %v603, %v601
  %v768 = vpack.c.b16 %v606, %v604
  %v769 = vpack.c.b16 %v607, %v605
  %v770 = vpack.c.b16 %v610, %v608
  %v771 = vpack.c.b16 %v611, %v609
  %v772 = vpack.c.b16 %v614, %v612
  %v773 = vpack.c.b16 %v615, %v613
  %v774 = vpack.c.b16 %v618, %v616
  %v775 = vpack.c.b16 %v619, %v617
  %v776 = vpack.c.b16 %v622, %v620
  %v777 = vpack.c.b16 %v623, %v621
  %v778 = vpack.c.b16 %v626, %v624
  %v779 = vpack.c.b16 %v627, %v625
  %v780 = vpack.c.b16 %v630, %v628
  %v781 = vpack.c.b16 %v631, %v629
  %v782 = vpack.c.b16 %v634, %v632
  %v783 = vpack.c.b16 %v635, %v633
  %v784 = vpack.c.b16 %v638, %v636
  %v785 = vpack.c.b16 %v639, %v637
  %v786 = vpack.c.b16 %v642, %v640
  %v787 = vpack.c.b16 %v643, %v641
  %932 = vmatprep.subr.bf16.mxu0 %v645
  %933 = vmatpush1.bf16.msra.mxu0 %v644
  %934 = vmatprep.subr.bf16.mxu0 %v647
  %935 = vmatpush1.bf16.msra.mxu0 %v646
  %936 = vmatprep.subr.bf16.mxu0 %v649
  %937 = vmatpush1.bf16.msra.mxu0 %v648
  %938 = vmatprep.subr.bf16.mxu0 %v651
  %939 = vmatpush1.bf16.msra.mxu0 %v650
  %940 = vmatprep.subr.bf16.mxu0 %v653
  %941 = vmatpush1.bf16.msra.mxu0 %v652
  %942 = vmatprep.subr.bf16.mxu0 %v655
  %943 = vmatpush1.bf16.msra.mxu0 %v654
  %944 = vmatprep.subr.bf16.mxu0 %v657
  %945 = vmatpush1.bf16.msra.mxu0 %v656
  %946 = vmatprep.subr.bf16.mxu0 %v659
  %947 = vmatpush1.bf16.msra.mxu0 %v658
  %948 = vmatprep.subr.bf16.mxu0 %v661
  %949 = vmatpush1.bf16.msra.mxu0 %v660
  %950 = vmatprep.subr.bf16.mxu0 %v663
  %951 = vmatpush1.bf16.msra.mxu0 %v662
  %952 = vmatprep.subr.bf16.mxu0 %v665
  %953 = vmatpush1.bf16.msra.mxu0 %v664
  %954 = vmatprep.subr.bf16.mxu0 %v667
  %955 = vmatpush1.bf16.msra.mxu0 %v666
  %956 = vmatprep.subr.bf16.mxu0 %v669
  %957 = vmatpush1.bf16.msra.mxu0 %v668
  %958 = vmatprep.subr.bf16.mxu0 %v671
  %959 = vmatpush1.bf16.msra.mxu0 %v670
  %960 = vmatprep.subr.bf16.mxu0 %v673
  %961 = vmatpush1.bf16.msra.mxu0 %v672
  %962 = vmatprep.subr.bf16.mxu0 %v675
  %963 = vmatpush1.bf16.msra.mxu0 %v674
  %964 = vmatprep.mubr.bf16.mxu0 %v195
  %965 = vmatmul.mubr.bf16.gmra.mrb[0].mxu0 %v194
  %v966 = vpop.f32.mrb[0].mxu0
  %v967 = vadd.f32 0.0, %v966
  %v968 = vpop.f32.mrb[0].mxu0
  %v969 = vadd.f32 0.0, %v968
  %v970 = vpop.f32.mrb[0].mxu0
  %v971 = vadd.f32 0.0, %v970
  %v972 = vpop.f32.mrb[0].mxu0
  %v973 = vadd.f32 0.0, %v972
  %974 = vdwg.mxu0
  %975 = vmatprep.subr.bf16.mxu0 %v677
  %976 = vmatpush1.bf16.msra.mxu0 %v676
  %977 = vmatprep.subr.bf16.mxu0 %v679
  %978 = vmatpush1.bf16.msra.mxu0 %v678
  %979 = vmatprep.subr.bf16.mxu0 %v681
  %980 = vmatpush1.bf16.msra.mxu0 %v680
  %981 = vmatprep.subr.bf16.mxu0 %v683
  %982 = vmatpush1.bf16.msra.mxu0 %v682
  %983 = vmatprep.subr.bf16.mxu0 %v685
  %984 = vmatpush1.bf16.msra.mxu0 %v684
  %985 = vmatprep.subr.bf16.mxu0 %v687
  %986 = vmatpush1.bf16.msra.mxu0 %v686
  %987 = vmatprep.subr.bf16.mxu0 %v689
  %988 = vmatpush1.bf16.msra.mxu0 %v688
  %989 = vmatprep.subr.bf16.mxu0 %v691
  %990 = vmatpush1.bf16.msra.mxu0 %v690
  %991 = vmatprep.subr.bf16.mxu0 %v693
  %992 = vmatpush1.bf16.msra.mxu0 %v692
  %993 = vmatprep.subr.bf16.mxu0 %v695
  %994 = vmatpush1.bf16.msra.mxu0 %v694
  %995 = vmatprep.subr.bf16.mxu0 %v697
  %996 = vmatpush1.bf16.msra.mxu0 %v696
  %997 = vmatprep.subr.bf16.mxu0 %v699
  %998 = vmatpush1.bf16.msra.mxu0 %v698
  %999 = vmatprep.subr.bf16.mxu0 %v701
  %1000 = vmatpush1.bf16.msra.mxu0 %v700
  %1001 = vmatprep.subr.bf16.mxu0 %v703
  %1002 = vmatpush1.bf16.msra.mxu0 %v702
  %1003 = vmatprep.subr.bf16.mxu0 %v705
  %1004 = vmatpush1.bf16.msra.mxu0 %v704
  %1005 = vmatprep.subr.bf16.mxu0 %v707
  %1006 = vmatpush1.bf16.msra.mxu0 %v706
  %1007 = vmatprep.mubr.bf16.mxu0 %v197
  %1008 = vmatmul.mubr.bf16.gmra.mrb[0].mxu0 %v196
  %v1009 = vpop.f32.mrb[0].mxu0
  %v1010 = vadd.f32 %v967, %v1009
  %v1011 = vpop.f32.mrb[0].mxu0
  %v1012 = vadd.f32 %v969, %v1011
  %v1013 = vpop.f32.mrb[0].mxu0
  %v1014 = vadd.f32 %v971, %v1013
  %v1015 = vpop.f32.mrb[0].mxu0
  %v1016 = vadd.f32 %v973, %v1015
  %1017 = vdwg.mxu0
  %1018 = vmatprep.subr.bf16.mxu0 %v709
  %1019 = vmatpush1.bf16.msra.mxu0 %v708
  %1020 = vmatprep.subr.bf16.mxu0 %v711
  %1021 = vmatpush1.bf16.msra.mxu0 %v710
  %1022 = vmatprep.subr.bf16.mxu0 %v713
  %1023 = vmatpush1.bf16.msra.mxu0 %v712
  %1024 = vmatprep.subr.bf16.mxu0 %v715
  %1025 = vmatpush1.bf16.msra.mxu0 %v714
  %1026 = vmatprep.subr.bf16.mxu0 %v717
  %1027 = vmatpush1.bf16.msra.mxu0 %v716
  %1028 = vmatprep.subr.bf16.mxu0 %v719
  %1029 = vmatpush1.bf16.msra.mxu0 %v718
  %1030 = vmatprep.subr.bf16.mxu0 %v721
  %1031 = vmatpush1.bf16.msra.mxu0 %v720
  %1032 = vmatprep.subr.bf16.mxu0 %v723
  %1033 = vmatpush1.bf16.msra.mxu0 %v722
  %1034 = vmatprep.subr.bf16.mxu0 %v725
  %1035 = vmatpush1.bf16.msra.mxu0 %v724
  %1036 = vmatprep.subr.bf16.mxu0 %v727
  %1037 = vmatpush1.bf16.msra.mxu0 %v726
  %1038 = vmatprep.subr.bf16.mxu0 %v729
  %1039 = vmatpush1.bf16.msra.mxu0 %v728
  %1040 = vmatprep.subr.bf16.mxu0 %v731
  %1041 = vmatpush1.bf16.msra.mxu0 %v730
  %1042 = vmatprep.subr.bf16.mxu0 %v733
  %1043 = vmatpush1.bf16.msra.mxu0 %v732
  %1044 = vmatprep.subr.bf16.mxu0 %v735
  %1045 = vmatpush1.bf16.msra.mxu0 %v734
  %1046 = vmatprep.subr.bf16.mxu0 %v737
  %1047 = vmatpush1.bf16.msra.mxu0 %v736
  %1048 = vmatprep.subr.bf16.mxu0 %v739
  %1049 = vmatpush1.bf16.msra.mxu0 %v738
  %1050 = vmatprep.mubr.bf16.mxu0 %v199
  %1051 = vmatmul.mubr.bf16.gmra.mrb[0].mxu0 %v198
  %v1052 = vpop.f32.mrb[0].mxu0
  %v1053 = vadd.f32 %v1010, %v1052
  %v1054 = vpop.f32.mrb[0].mxu0
  %v1055 = vadd.f32 %v1012, %v1054
  %v1056 = vpop.f32.mrb[0].mxu0
  %v1057 = vadd.f32 %v1014, %v1056
  %v1058 = vpop.f32.mrb[0].mxu0
  %v1059 = vadd.f32 %v1016, %v1058
  %1060 = vdwg.mxu0
  %1061 = vmatprep.subr.bf16.mxu0 %v741
  %1062 = vmatpush1.bf16.msra.mxu0 %v740
  %1063 = vmatprep.subr.bf16.mxu0 %v743
  %1064 = vmatpush1.bf16.msra.mxu0 %v742
  %1065 = vmatprep.subr.bf16.mxu0 %v745
  %1066 = vmatpush1.bf16.msra.mxu0 %v744
  %1067 = vmatprep.subr.bf16.mxu0 %v747
  %1068 = vmatpush1.bf16.msra.mxu0 %v746
  %1069 = vmatprep.subr.bf16.mxu0 %v749
  %1070 = vmatpush1.bf16.msra.mxu0 %v748
  %1071 = vmatprep.subr.bf16.mxu0 %v751
  %1072 = vmatpush1.bf16.msra.mxu0 %v750
  %1073 = vmatprep.subr.bf16.mxu0 %v753
  %1074 = vmatpush1.bf16.msra.mxu0 %v752
  %1075 = vmatprep.subr.bf16.mxu0 %v755
  %1076 = vmatpush1.bf16.msra.mxu0 %v754
  %1077 = vmatprep.subr.bf16.mxu0 %v757
  %1078 = vmatpush1.bf16.msra.mxu0 %v756
  %1079 = vmatprep.subr.bf16.mxu0 %v759
  %1080 = vmatpush1.bf16.msra.mxu0 %v758
  %1081 = vmatprep.subr.bf16.mxu0 %v761
  %1082 = vmatpush1.bf16.msra.mxu0 %v760
  %1083 = vmatprep.subr.bf16.mxu0 %v763
  %1084 = vmatpush1.bf16.msra.mxu0 %v762
  %1085 = vmatprep.subr.bf16.mxu0 %v765
  %1086 = vmatpush1.bf16.msra.mxu0 %v764
  %1087 = vmatprep.subr.bf16.mxu0 %v767
  %1088 = vmatpush1.bf16.msra.mxu0 %v766
  %1089 = vmatprep.subr.bf16.mxu0 %v769
  %1090 = vmatpush1.bf16.msra.mxu0 %v768
  %1091 = vmatprep.subr.bf16.mxu0 %v771
  %1092 = vmatpush1.bf16.msra.mxu0 %v770
  %1093 = vmatprep.mubr.bf16.mxu0 %v201
  %1094 = vmatmul.mubr.bf16.gmra.mrb[0].mxu0 %v200
  %v1095 = vpop.f32.mrb[0].mxu0
  %v1096 = vadd.f32 %v1053, %v1095
  %v1097 = vpop.f32.mrb[0].mxu0
  %v1098 = vadd.f32 %v1055, %v1097
  %v1099 = vpop.f32.mrb[0].mxu0
  %v1100 = vadd.f32 %v1057, %v1099
  %v1101 = vpop.f32.mrb[0].mxu0
  %v1102 = vadd.f32 %v1059, %v1101
  %1103 = vdwg.mxu0
  %1104 = vmatprep.subr.bf16.mxu0 %v773
  %1105 = vmatpush1.bf16.msra.mxu0 %v772
  %1106 = vmatprep.subr.bf16.mxu0 %v775
  %1107 = vmatpush1.bf16.msra.mxu0 %v774
  %1108 = vmatprep.subr.bf16.mxu0 %v777
  %1109 = vmatpush1.bf16.msra.mxu0 %v776
  %1110 = vmatprep.subr.bf16.mxu0 %v779
  %1111 = vmatpush1.bf16.msra.mxu0 %v778
  %1112 = vmatprep.subr.bf16.mxu0 %v781
  %1113 = vmatpush1.bf16.msra.mxu0 %v780
  %1114 = vmatprep.subr.bf16.mxu0 %v783
  %1115 = vmatpush1.bf16.msra.mxu0 %v782
  %1116 = vmatprep.subr.bf16.mxu0 %v785
  %1117 = vmatpush1.bf16.msra.mxu0 %v784
  %1118 = vmatprep.subr.bf16.mxu0 %v787
  %1119 = vmatpush1.bf16.msra.mxu0 %v786
  %1120 = vmatprep.subr.bf16.mxu0 0
  %1121 = vmatpush1.bf16.msra.mxu0 0
  %1122 = vmatprep.subr.bf16.mxu0 0
  %1123 = vmatpush1.bf16.msra.mxu0 0
  %1124 = vmatprep.subr.bf16.mxu0 0
  %1125 = vmatpush1.bf16.msra.mxu0 0
  %1126 = vmatprep.subr.bf16.mxu0 0
  %1127 = vmatpush1.bf16.msra.mxu0 0
  %1128 = vmatprep.subr.bf16.mxu0 0
  %1129 = vmatpush1.bf16.msra.mxu0 0
  %1130 = vmatprep.subr.bf16.mxu0 0
  %1131 = vmatpush1.bf16.msra.mxu0 0
  %1132 = vmatprep.subr.bf16.mxu0 0
  %1133 = vmatpush1.bf16.msra.mxu0 0
  %1134 = vmatprep.subr.bf16.mxu0 0
  %1135 = vmatpush1.bf16.msra.mxu0 0
  %1136 = vmatprep.mubr.bf16.mxu0 0
  %1137 = vmatmul.mubr.bf16.gmra.mrb[0].mxu0 %v202
  %v1138 = vpop.f32.mrb[0].mxu0
  %v1139 = vadd.f32 %v1096, %v1138
  %v1140 = vpop.f32.mrb[0].mxu0
  %v1141 = vadd.f32 %v1098, %v1140
  %v1142 = vpop.f32.mrb[0].mxu0
  %v1143 = vadd.f32 %v1100, %v1142
  %v1144 = vpop.f32.mrb[0].mxu0
  %v1145 = vadd.f32 %v1102, %v1144
  %1146 = vdwg.mxu0
  %v1147 = vmax.f32 %v1139, 0.0
  %v1148 = vmax.f32 %v1141, 0.0
  %v1149 = vmax.f32 %v1143, 0.0
  %v1150 = vmax.f32 %v1145, 0.0
  %1151 = vst [vmem:[%s2] sm:$0xff] %v1147
  %1152 = vst [vmem:[%s2 + $0x8] sm:$0xff] %v1148
  %1153 = vst [vmem:[%s2 + $0x10] sm:$0xff] %v1149
  %1154 = vst [vmem:[%s2 + $0x18] sm:$0xff] %v1150
  // Predicated region
  $region10: #{a_call__.5} parent=0 // pred_check
    _
  $region11: #{a_call__.5} parent=0 // pred_check_branch
    %1156 = sbr.rel (0) target = $region13
  $region12: #{a_call__.5} parent=0 // pred_region
    _
  $region13: #{a_call__.5} parent=0 // pred_fallthru
    _
  // Predicated region
  $region14: #{a_call__.5} parent=0 // pred_check
    _
  $region15: #{a_call__.5} parent=0 // pred_check_branch
    %1158 = sbr.rel (0) target = $region17
  $region16: #{a_call__.5} parent=0 // pred_region
    _
  $region17: #{a_call__.5} parent=0 // pred_fallthru
    _

</llo_original>
